<compile_context>
chip_gen: v7x
topology: tpu7x:2x2x1
jax: 0.10.0
libtpu: 0.0.40
codegen_flags: <defaults>
</compile_context>

<pallas_src>
import jax
import jax.numpy as jnp
from jax.experimental import pallas as pl
from jax.experimental.pallas import tpu as pltpu


# ----------------------------------------------------------------------------- kernel
def attention_block_kernel(g_ref, x_ref, wg_ref, wx_ref, bg_ref, bx_ref,
                           wp_ref, bp_ref, out_ref):
    """One row-tile of the attention gate.

    g_ref  : (TM, F_g)   bf16   gating signal rows
    x_ref  : (TM, F_l)   bf16   skip-connection rows
    wg_ref : (F_g, F_int) bf16  BN-folded W_g
    wx_ref : (F_l, F_int) bf16  BN-folded W_x
    bg_ref : (1, F_int)  f32    BN-folded bias of W_g branch
    bx_ref : (1, F_int)  f32    BN-folded bias of W_x branch
    wp_ref : (1, F_int)  f32    BN-folded psi weight (row vector)
    bp_ref : (1, 1)      f32    BN-folded psi bias
    out_ref: (TM, F_l)   f32    x * attention
    """
    g = g_ref[...]                                            # bf16
    x = x_ref[...]                                            # bf16

    g1 = jnp.dot(g, wg_ref[...], preferred_element_type=jnp.float32) + bg_ref[...]
    x1 = jnp.dot(x, wx_ref[...], preferred_element_type=jnp.float32) + bx_ref[...]
    a = jnp.maximum(g1 + x1, 0.0)                             # ReLU, f32 (TM, F_int)

    # psi: F_int -> 1 "conv" done as multiply + cross-lane reduce (XLU is idle here).
    z = jnp.sum(a * wp_ref[...], axis=-1, keepdims=True) + bp_ref[...]   # (TM, 1) f32
    psi = jax.nn.sigmoid(z)                                   # EUP

    out_ref[...] = (x.astype(jnp.float32) * psi).astype(out_ref.dtype)


# ----------------------------------------------------------------------------- params
def _fold_conv_bn(conv_w, conv_b, bn_stats, eps=1e-5):
    """Fold eval-mode BatchNorm into a 1x1 conv.

    conv_w: (C_out, C_in), conv_b: (C_out,), bn_stats = (gamma, beta, mean, var).
    Returns (C_in, C_out) matmul weight and (C_out,) bias.
    """
    gamma, beta, mean, var = bn_stats
    scale = gamma / jnp.sqrt(var + eps)
    w = (conv_w * scale[:, None]).T
    b = (conv_b - mean) * scale + beta
    return w, b


def init_attention_params(key, F_g, F_l, F_int):
    """Random but deterministic conv + BN parameters (NCHW / torch layout)."""
    ks = jax.random.split(key, 18)

    def conv_w(k, cout, cin):
        bound = 1.0 / (cin ** 0.5)
        return jax.random.uniform(k, (cout, cin), jnp.float32, -bound, bound)

    def bn_stats(k0, k1, k2, k3, c):
        gamma = jax.random.uniform(k0, (c,), jnp.float32, 0.5, 1.5)
        beta = 0.1 * jax.random.normal(k1, (c,), jnp.float32)
        mean = 0.1 * jax.random.normal(k2, (c,), jnp.float32)
        var = jax.random.uniform(k3, (c,), jnp.float32, 0.5, 1.5)
        return (gamma, beta, mean, var)

    return dict(
        wg_conv=conv_w(ks[0], F_int, F_g),
        bg_conv=jax.random.uniform(ks[1], (F_int,), jnp.float32, -0.1, 0.1),
        bn_g=bn_stats(ks[2], ks[3], ks[4], ks[5], F_int),
        wx_conv=conv_w(ks[6], F_int, F_l),
        bx_conv=jax.random.uniform(ks[7], (F_int,), jnp.float32, -0.1, 0.1),
        bn_x=bn_stats(ks[8], ks[9], ks[10], ks[11], F_int),
        wp_conv=conv_w(ks[12], 1, F_int),
        bp_conv=jax.random.uniform(ks[13], (1,), jnp.float32, -0.1, 0.1),
        bn_p=bn_stats(ks[14], ks[15], ks[16], ks[17], 1),
    )


# ----------------------------------------------------------------------------- wrapper
def attention_block_forward(g, x, params, *, tile_m=256):
    """g: (B, F_g, H, W), x: (B, F_l, H, W) -> (B, F_l, H, W), all f32 NCHW."""
    B, F_g, H, W = g.shape
    F_l = x.shape[1]

    # Fold BN into the 1x1 convs (inference semantics).
    wg, bg = _fold_conv_bn(params["wg_conv"], params["bg_conv"], params["bn_g"])
    wx, bx = _fold_conv_bn(params["wx_conv"], params["bx_conv"], params["bn_x"])
    wp, bp = _fold_conv_bn(params["wp_conv"], params["bp_conv"], params["bn_p"])
    F_int = wg.shape[1]

    # NCHW -> (rows, channels): channels on the lane axis.
    g2 = jnp.transpose(g, (0, 2, 3, 1)).reshape(-1, F_g)
    x2 = jnp.transpose(x, (0, 2, 3, 1)).reshape(-1, F_l)
    n_rows = g2.shape[0]

    grid_m = pl.cdiv(n_rows, tile_m)
    n_pad = grid_m * tile_m
    if n_pad != n_rows:
        g2 = jnp.pad(g2, ((0, n_pad - n_rows), (0, 0)))
        x2 = jnp.pad(x2, ((0, n_pad - n_rows), (0, 0)))

    # bf16 streaming operands, f32 accumulation / pointwise path.
    g2 = g2.astype(jnp.bfloat16)
    x2 = x2.astype(jnp.bfloat16)
    wg_b = wg.astype(jnp.bfloat16)
    wx_b = wx.astype(jnp.bfloat16)
    bg2 = bg.reshape(1, F_int).astype(jnp.float32)
    bx2 = bx.reshape(1, F_int).astype(jnp.float32)
    wp_row = wp.reshape(1, F_int).astype(jnp.float32)
    bp2 = bp.reshape(1, 1).astype(jnp.float32)

    out = pl.pallas_call(
        attention_block_kernel,
        out_shape=jax.ShapeDtypeStruct((n_pad, F_l), jnp.float32),
        grid=(grid_m,),
        in_specs=[
            pl.BlockSpec((tile_m, F_g), lambda i: (i, 0)),      # g rows (streamed)
            pl.BlockSpec((tile_m, F_l), lambda i: (i, 0)),      # x rows (streamed)
            pl.BlockSpec((F_g, F_int), lambda i: (0, 0)),       # Wg (resident)
            pl.BlockSpec((F_l, F_int), lambda i: (0, 0)),       # Wx (resident)
            pl.BlockSpec((1, F_int), lambda i: (0, 0)),         # bg
            pl.BlockSpec((1, F_int), lambda i: (0, 0)),         # bx
            pl.BlockSpec((1, F_int), lambda i: (0, 0)),         # w_psi (row)
            pl.BlockSpec((1, 1), lambda i: (0, 0)),             # b_psi
        ],
        out_specs=pl.BlockSpec((tile_m, F_l), lambda i: (i, 0)),
        compiler_params=pltpu.CompilerParams(
            dimension_semantics=("parallel",),
            vmem_limit_bytes=32 * 1024 * 1024,
        ),
    )(g2, x2, wg_b, wx_b, bg2, bx2, wp_row, bp2)

    out = out[:n_rows]
    return jnp.transpose(out.reshape(B, H, W, F_l), (0, 3, 1, 2))


# ----------------------------------------------------------------------------- reference
def attention_block_reference(g, x, params, eps=1e-5):
    """Pure-JAX f32 reference following the torch graph (eval-mode BN)."""
    def conv1x1(t, w, b):
        return jnp.einsum("bchw,oc->bohw", t, w) + b[None, :, None, None]

    def bn(t, stats):
        gamma, beta, mean, var = stats
        inv = gamma / jnp.sqrt(var + eps)
        return (t - mean[None, :, None, None]) * inv[None, :, None, None] \
            + beta[None, :, None, None]

    g1 = bn(conv1x1(g, params["wg_conv"], params["bg_conv"]), params["bn_g"])
    x1 = bn(conv1x1(x, params["wx_conv"], params["bx_conv"]), params["bn_x"])
    a = jnp.maximum(g1 + x1, 0.0)
    psi = jax.nn.sigmoid(bn(conv1x1(a, params["wp_conv"], params["bp_conv"]),
                            params["bn_p"]))
    return x * psi


# ----------------------------------------------------------------------------- main
if __name__ == "__main__":
    F_g, F_l, F_int = 32, 32, 16
    B, H, W = 2, 16, 16                     # 512 rows -> grid of 2 tiles of 256

    key = jax.random.PRNGKey(0)
    kg, kx, kp = jax.random.split(key, 3)
    g = jax.random.normal(kg, (B, F_g, H, W), jnp.float32)
    x = jax.random.normal(kx, (B, F_l, H, W), jnp.float32)
    params = init_attention_params(kp, F_g, F_l, F_int)

    out = attention_block_forward(g, x, params, tile_m=256)
    out = jax.block_until_ready(out)

    ref = attention_block_reference(g, x, params)
    assert out.shape == (B, F_l, H, W)
    max_err = float(jnp.max(jnp.abs(out - ref)))
    # Tolerance covers bf16 quantization of the streamed operands / weights.
    assert jnp.allclose(out, ref, atol=5e-2, rtol=5e-2), f"mismatch, max err {max_err}"
    print("KERNEL_OK")
</pallas_src>

<mosaic_0001>
module attributes {stable_mosaic.version = 11 : i64} {
  func.func @attention_block_kernel(%arg0: i32, %arg1: memref<256x32xbf16, #tpu.memory_space<vmem>>, %arg2: memref<256x32xbf16, #tpu.memory_space<vmem>>, %arg3: memref<32x16xbf16, #tpu.memory_space<vmem>>, %arg4: memref<32x16xbf16, #tpu.memory_space<vmem>>, %arg5: memref<1x16xf32, #tpu.memory_space<vmem>>, %arg6: memref<1x16xf32, #tpu.memory_space<vmem>>, %arg7: memref<1x16xf32, #tpu.memory_space<vmem>>, %arg8: memref<1x1xf32, #tpu.memory_space<vmem>>, %arg9: memref<256x32xf32, #tpu.memory_space<vmem>>) attributes {dimension_semantics = [#tpu.dimension_semantics<parallel>], iteration_bounds = array<i64: 2>, scalar_prefetch = 0 : i64, scratch_operands = 0 : i64, tpu.core_type = #tpu.core_type<tc>, window_params = [{transform_indices = @transform_0, window_bounds = array<i64: 256, 32>}, {transform_indices = @transform_1, window_bounds = array<i64: 256, 32>}, {pipeline_mode = #tpu.pipeline_mode<synchronous>, transform_indices = @transform_2, window_bounds = array<i64: 32, 16>}, {pipeline_mode = #tpu.pipeline_mode<synchronous>, transform_indices = @transform_3, window_bounds = array<i64: 32, 16>}, {pipeline_mode = #tpu.pipeline_mode<synchronous>, transform_indices = @transform_4, window_bounds = array<i64: 1, 16>}, {pipeline_mode = #tpu.pipeline_mode<synchronous>, transform_indices = @transform_5, window_bounds = array<i64: 1, 16>}, {pipeline_mode = #tpu.pipeline_mode<synchronous>, transform_indices = @transform_6, window_bounds = array<i64: 1, 16>}, {pipeline_mode = #tpu.pipeline_mode<synchronous>, transform_indices = @transform_7, window_bounds = array<i64: 1, 1>}, {transform_indices = @transform_8, window_bounds = array<i64: 256, 32>}]} {
    %c0 = arith.constant 0 : index
    %c0_0 = arith.constant 0 : index
    %0 = vector.load %arg1[%c0, %c0_0] : memref<256x32xbf16, #tpu.memory_space<vmem>>, vector<256x32xbf16>
    %c0_1 = arith.constant 0 : index
    %c0_2 = arith.constant 0 : index
    %1 = vector.load %arg2[%c0_1, %c0_2] : memref<256x32xbf16, #tpu.memory_space<vmem>>, vector<256x32xbf16>
    %c0_3 = arith.constant 0 : index
    %c0_4 = arith.constant 0 : index
    %2 = vector.load %arg3[%c0_3, %c0_4] : memref<32x16xbf16, #tpu.memory_space<vmem>>, vector<32x16xbf16>
    %cst = arith.constant dense<0.000000e+00> : vector<256x16xf32>
    %3 = tpu.matmul %0, %2, %cst {dimension_numbers = #tpu.dot_dimension_numbers<[1], [0], [0], [1], [0, 0, 1, 1], [], []>} : vector<256x32xbf16>, vector<32x16xbf16>, vector<256x16xf32> -> vector<256x16xf32>
    %c0_5 = arith.constant 0 : index
    %c0_6 = arith.constant 0 : index
    %4 = vector.load %arg5[%c0_5, %c0_6] : memref<1x16xf32, #tpu.memory_space<vmem>>, vector<1x16xf32>
    %5 = vector.broadcast %4 : vector<1x16xf32> to vector<256x16xf32>
    %6 = arith.addf %3, %5 : vector<256x16xf32>
    %c0_7 = arith.constant 0 : index
    %c0_8 = arith.constant 0 : index
    %7 = vector.load %arg4[%c0_7, %c0_8] : memref<32x16xbf16, #tpu.memory_space<vmem>>, vector<32x16xbf16>
    %cst_9 = arith.constant dense<0.000000e+00> : vector<256x16xf32>
    %8 = tpu.matmul %1, %7, %cst_9 {dimension_numbers = #tpu.dot_dimension_numbers<[1], [0], [0], [1], [0, 0, 1, 1], [], []>} : vector<256x32xbf16>, vector<32x16xbf16>, vector<256x16xf32> -> vector<256x16xf32>
    %c0_10 = arith.constant 0 : index
    %c0_11 = arith.constant 0 : index
    %9 = vector.load %arg6[%c0_10, %c0_11] : memref<1x16xf32, #tpu.memory_space<vmem>>, vector<1x16xf32>
    %10 = vector.broadcast %9 : vector<1x16xf32> to vector<256x16xf32>
    %11 = arith.addf %8, %10 : vector<256x16xf32>
    %12 = arith.addf %6, %11 : vector<256x16xf32>
    %cst_12 = arith.constant 0.000000e+00 : f32
    %13 = vector.broadcast %cst_12 : f32 to vector<256x16xf32>
    %14 = arith.maximumf %12, %13 : vector<256x16xf32>
    %c0_13 = arith.constant 0 : index
    %c0_14 = arith.constant 0 : index
    %15 = vector.load %arg7[%c0_13, %c0_14] : memref<1x16xf32, #tpu.memory_space<vmem>>, vector<1x16xf32>
    %16 = vector.broadcast %15 : vector<1x16xf32> to vector<256x16xf32>
    %17 = arith.mulf %14, %16 : vector<256x16xf32>
    %cst_15 = arith.constant dense<0.000000e+00> : vector<256xf32>
    %18 = vector.multi_reduction <add>, %17, %cst_15 [1] : vector<256x16xf32> to vector<256xf32>
    %19 = vector.shape_cast %18 : vector<256xf32> to vector<256x1xf32>
    %c0_16 = arith.constant 0 : index
    %c0_17 = arith.constant 0 : index
    %20 = vector.load %arg8[%c0_16, %c0_17] : memref<1x1xf32, #tpu.memory_space<vmem>>, vector<1x1xf32>
    %21 = vector.broadcast %20 : vector<1x1xf32> to vector<256x1xf32>
    %22 = arith.addf %19, %21 : vector<256x1xf32>
    %23 = arith.negf %22 : vector<256x1xf32>
    %24 = math.exp %23 : vector<256x1xf32>
    %cst_18 = arith.constant 1.000000e+00 : f32
    %25 = vector.broadcast %cst_18 : f32 to vector<256x1xf32>
    %26 = arith.addf %25, %24 : vector<256x1xf32>
    %27 = arith.divf %25, %26 : vector<256x1xf32>
    %28 = arith.extf %1 : vector<256x32xbf16> to vector<256x32xf32>
    %29 = vector.broadcast %27 : vector<256x1xf32> to vector<256x32xf32>
    %30 = arith.mulf %28, %29 : vector<256x32xf32>
    %c0_19 = arith.constant 0 : index
    %c0_20 = arith.constant 0 : index
    %31 = vector.load %arg9[%c0_19, %c0_20] : memref<256x32xf32, #tpu.memory_space<vmem>>, vector<256x32xf32>
    tpu.vector_store %arg9[%c0_19, %c0_20], %30 {strides = array<i32>} : memref<256x32xf32, #tpu.memory_space<vmem>>, vector<256x32xf32>,
    return
  }
  func.func @transform_0(%arg0: i32) -> (i32, i32) {
    %c0_i32 = arith.constant 0 : i32
    %c0_i32_0 = arith.constant 0 : i32
    return %arg0, %c0_i32 : i32, i32
  }
  func.func @transform_1(%arg0: i32) -> (i32, i32) {
    %c0_i32 = arith.constant 0 : i32
    %c0_i32_0 = arith.constant 0 : i32
    return %arg0, %c0_i32 : i32, i32
  }
  func.func @transform_2(%arg0: i32) -> (i32, i32) {
    %c0_i32 = arith.constant 0 : i32
    %c0_i32_0 = arith.constant 0 : i32
    %c0_i32_1 = arith.constant 0 : i32
    return %c0_i32, %c0_i32_0 : i32, i32
  }
  func.func @transform_3(%arg0: i32) -> (i32, i32) {
    %c0_i32 = arith.constant 0 : i32
    %c0_i32_0 = arith.constant 0 : i32
    %c0_i32_1 = arith.constant 0 : i32
    return %c0_i32, %c0_i32_0 : i32, i32
  }
  func.func @transform_4(%arg0: i32) -> (i32, i32) {
    %c0_i32 = arith.constant 0 : i32
    %c0_i32_0 = arith.constant 0 : i32
    %c0_i32_1 = arith.constant 0 : i32
    return %c0_i32, %c0_i32_0 : i32, i32
  }
  func.func @transform_5(%arg0: i32) -> (i32, i32) {
    %c0_i32 = arith.constant 0 : i32
    %c0_i32_0 = arith.constant 0 : i32
    %c0_i32_1 = arith.constant 0 : i32
    return %c0_i32, %c0_i32_0 : i32, i32
  }
  func.func @transform_6(%arg0: i32) -> (i32, i32) {
    %c0_i32 = arith.constant 0 : i32
    %c0_i32_0 = arith.constant 0 : i32
    %c0_i32_1 = arith.constant 0 : i32
    return %c0_i32, %c0_i32_0 : i32, i32
  }
  func.func @transform_7(%arg0: i32) -> (i32, i32) {
    %c0_i32 = arith.constant 0 : i32
    %c0_i32_0 = arith.constant 0 : i32
    %c0_i32_1 = arith.constant 0 : i32
    return %c0_i32, %c0_i32_0 : i32, i32
  }
  func.func @transform_8(%arg0: i32) -> (i32, i32) {
    %c0_i32 = arith.constant 0 : i32
    %c0_i32_0 = arith.constant 0 : i32
    return %arg0, %c0_i32 : i32, i32
  }
}

</mosaic_0001>

<llo_original>
// kernel: tpu_custom_call.1
$region0: #{tpu_custom_call.1}
  #allocation0 [shape = 'u32[]', space=smem, size = 0x4, offset = 0x4, fixed_abs, tag = 'smem constant byte address 0x4 - core index']
  #allocation1 [shape = 'u32[144,128]{1,0:T(1,128)}', space=vmem, size = 0x12000, scoped, tag = 'internal scratch']
  #allocation2 [shape = 'f32[1,1]{1,0:T(1,128)S(1)}', space=vmem, size = 0x200, scoped, tag = 'scoped memory for tpu_custom_call.1']
  %s0 = inlined_call_operand.vmem [shape: bf16[512,32], index: 0, kind: input, shape index: {}]
  %s1 = inlined_call_operand.vmem [shape: bf16[512,32], index: 1, kind: input, shape index: {}]
  %s2 = inlined_call_operand.vmem [shape: bf16[32,16], index: 2, kind: input, shape index: {}]
  %s3 = inlined_call_operand.vmem [shape: bf16[32,16], index: 3, kind: input, shape index: {}]
  %s4 = inlined_call_operand.vmem [shape: f32[1,16], index: 4, kind: input, shape index: {}]
  %s5 = inlined_call_operand.vmem [shape: f32[1,16], index: 5, kind: input, shape index: {}]
  %s6 = inlined_call_operand.vmem [shape: f32[1,16], index: 6, kind: input, shape index: {}]
  %s7 = inlined_call_operand.<no memory space> [shape: f32[1,1], index: 7, kind: input, shape index: {}]
  %s8 = inlined_call_operand.vmem [shape: f32[512,32], index: 8, kind: output, shape index: {}]
  %s9 = sld [smem:[#allocation0]]
  $region65: #{tpu_custom_call.1} parent=0
    _
  %s11 = ssub.s32 1, %s9
  %s12 = scalar_select 0, %s11, %s9
  %v13 = vstv %s7
  %14 = vst [vmem:[#allocation2] sm:$0x1] %v13
  loop: start=0, step=1, limit=4
  $region2: #{tpu_custom_call.1} parent=0 // loop_pre_header
    _
  $region3: #{tpu_custom_call.1} parent=0 // loop_header
    %s16 = sphi 0, %s20
    %p17 = scmp.ge.s32.totalorder %s16, 4
    %s26 = sphi 0, %s28
    %s29 = sphi 0, %s26
    %s30 = sphi 0, %s29
    %s46 = sphi 0, %s30
    %s52 = sphi 0, %s54
    %s55 = sphi 0, %s52
    %s56 = sphi 0, %s55
    %s72 = sphi 0, %s56
    %s76 = sphi 0, %s76
    %s78 = sphi 0, %s76
    %s79 = sphi 0, %s78
    %s93 = sphi 0, %s79
    %s97 = sphi 0, %s97
    %s99 = sphi 0, %s97
    %s100 = sphi 0, %s99
    %s114 = sphi 0, %s100
    %s118 = sphi 0, %s118
    %s120 = sphi 0, %s118
    %s121 = sphi 0, %s120
    %s135 = sphi 0, %s121
    %s139 = sphi 0, %s139
    %s141 = sphi 0, %s139
    %s142 = sphi 0, %s141
    %s156 = sphi 0, %s142
    %s160 = sphi 0, %s160
    %s162 = sphi 0, %s160
    %s163 = sphi 0, %s162
    %s177 = sphi 0, %s163
    %s181 = sphi 0, %s181
    %s183 = sphi 0, %s181
    %s184 = sphi 0, %s183
    %s198 = sphi 0, %s184
    %s204 = sphi 0, %s206
    %s207 = sphi 0, %s204
    %s208 = sphi 0, %s207
    %s224 = sphi 0, %s208
  $region4: #{tpu_custom_call.1} parent=0 // loop_header_branch
    %19 = sbr.rel (%p17) target = $region8
  $region5: #{tpu_custom_call.1} parent=0 // loop_body
    %s21 = ssub.s32 %s16, 1
    %s22 = ssub.s32 %s16, 2
    %s23 = sadd.s32 %s16, 1
    %s24 = ssub.s32 %s16, %s23
    %p25 = scmp.eq.s32.totalorder %s24, 0
    %s27 = sadd.s32 %s26, 1
    %s28 = scalar_select %p25, %s26, %s27
    %p31 = pneg %p25
    %p32 = scmp.eq.s32.totalorder %s16, 1
    %p33 = por %p31, %p32
    %p34 = scmp.ne.s32.totalorder %s26, %s29
    %p35 = scmp.eq.s32.totalorder %s16, 0
    %p36 = por %p34, %p35
    %p37 = scmp.ne.s32.totalorder %s26, %s29
    %p38 = scmp.eq.s32.totalorder %s21, 1
    %p39 = por %p37, %p38
    %p40 = scmp.ne.s32.totalorder %s29, %s30
    %p41 = scmp.eq.s32.totalorder %s21, 0
    %p42 = por %p40, %p41
    %p43 = scmp.ne.s32.totalorder %s29, %s30
    %p44 = scmp.eq.s32.totalorder %s22, 1
    %p45 = por %p43, %p44
    %p47 = scmp.ne.s32.totalorder %s30, %s46
    %p48 = scmp.eq.s32.totalorder %s22, 0
    %p49 = por %p47, %p48
    %s50 = ssub.s32 %s16, %s23
    %p51 = scmp.eq.s32.totalorder %s50, 0
    %s53 = sadd.s32 %s52, 1
    %s54 = scalar_select %p51, %s52, %s53
    %p57 = pneg %p51
    %p58 = scmp.eq.s32.totalorder %s16, 1
    %p59 = por %p57, %p58
    %p60 = scmp.ne.s32.totalorder %s52, %s55
    %p61 = scmp.eq.s32.totalorder %s16, 0
    %p62 = por %p60, %p61
    %p63 = scmp.ne.s32.totalorder %s52, %s55
    %p64 = scmp.eq.s32.totalorder %s21, 1
    %p65 = por %p63, %p64
    %p66 = scmp.ne.s32.totalorder %s55, %s56
    %p67 = scmp.eq.s32.totalorder %s21, 0
    %p68 = por %p66, %p67
    %p69 = scmp.ne.s32.totalorder %s55, %s56
    %p70 = scmp.eq.s32.totalorder %s22, 1
    %p71 = por %p69, %p70
    %p73 = scmp.ne.s32.totalorder %s56, %s72
    %p74 = scmp.eq.s32.totalorder %s22, 0
    %p75 = por %p73, %p74
    %s77 = sadd.s32 %s76, 1
    %p80 = scmp.eq.s32.totalorder %s16, 1
    %p81 = scmp.ne.s32.totalorder %s76, %s78
    %p82 = scmp.eq.s32.totalorder %s16, 0
    %p83 = por %p81, %p82
    %p84 = scmp.ne.s32.totalorder %s76, %s78
    %p85 = scmp.eq.s32.totalorder %s21, 1
    %p86 = por %p84, %p85
    %p87 = scmp.ne.s32.totalorder %s78, %s79
    %p88 = scmp.eq.s32.totalorder %s21, 0
    %p89 = por %p87, %p88
    %p90 = scmp.ne.s32.totalorder %s78, %s79
    %p91 = scmp.eq.s32.totalorder %s22, 1
    %p92 = por %p90, %p91
    %p94 = scmp.ne.s32.totalorder %s79, %s93
    %p95 = scmp.eq.s32.totalorder %s22, 0
    %p96 = por %p94, %p95
    %s98 = sadd.s32 %s97, 1
    %p101 = scmp.eq.s32.totalorder %s16, 1
    %p102 = scmp.ne.s32.totalorder %s97, %s99
    %p103 = scmp.eq.s32.totalorder %s16, 0
    %p104 = por %p102, %p103
    %p105 = scmp.ne.s32.totalorder %s97, %s99
    %p106 = scmp.eq.s32.totalorder %s21, 1
    %p107 = por %p105, %p106
    %p108 = scmp.ne.s32.totalorder %s99, %s100
    %p109 = scmp.eq.s32.totalorder %s21, 0
    %p110 = por %p108, %p109
    %p111 = scmp.ne.s32.totalorder %s99, %s100
    %p112 = scmp.eq.s32.totalorder %s22, 1
    %p113 = por %p111, %p112
    %p115 = scmp.ne.s32.totalorder %s100, %s114
    %p116 = scmp.eq.s32.totalorder %s22, 0
    %p117 = por %p115, %p116
    %s119 = sadd.s32 %s118, 1
    %p122 = scmp.eq.s32.totalorder %s16, 1
    %p123 = scmp.ne.s32.totalorder %s118, %s120
    %p124 = scmp.eq.s32.totalorder %s16, 0
    %p125 = por %p123, %p124
    %p126 = scmp.ne.s32.totalorder %s118, %s120
    %p127 = scmp.eq.s32.totalorder %s21, 1
    %p128 = por %p126, %p127
    %p129 = scmp.ne.s32.totalorder %s120, %s121
    %p130 = scmp.eq.s32.totalorder %s21, 0
    %p131 = por %p129, %p130
    %p132 = scmp.ne.s32.totalorder %s120, %s121
    %p133 = scmp.eq.s32.totalorder %s22, 1
    %p134 = por %p132, %p133
    %p136 = scmp.ne.s32.totalorder %s121, %s135
    %p137 = scmp.eq.s32.totalorder %s22, 0
    %p138 = por %p136, %p137
    %s140 = sadd.s32 %s139, 1
    %p143 = scmp.eq.s32.totalorder %s16, 1
    %p144 = scmp.ne.s32.totalorder %s139, %s141
    %p145 = scmp.eq.s32.totalorder %s16, 0
    %p146 = por %p144, %p145
    %p147 = scmp.ne.s32.totalorder %s139, %s141
    %p148 = scmp.eq.s32.totalorder %s21, 1
    %p149 = por %p147, %p148
    %p150 = scmp.ne.s32.totalorder %s141, %s142
    %p151 = scmp.eq.s32.totalorder %s21, 0
    %p152 = por %p150, %p151
    %p153 = scmp.ne.s32.totalorder %s141, %s142
    %p154 = scmp.eq.s32.totalorder %s22, 1
    %p155 = por %p153, %p154
    %p157 = scmp.ne.s32.totalorder %s142, %s156
    %p158 = scmp.eq.s32.totalorder %s22, 0
    %p159 = por %p157, %p158
    %s161 = sadd.s32 %s160, 1
    %p164 = scmp.eq.s32.totalorder %s16, 1
    %p165 = scmp.ne.s32.totalorder %s160, %s162
    %p166 = scmp.eq.s32.totalorder %s16, 0
    %p167 = por %p165, %p166
    %p168 = scmp.ne.s32.totalorder %s160, %s162
    %p169 = scmp.eq.s32.totalorder %s21, 1
    %p170 = por %p168, %p169
    %p171 = scmp.ne.s32.totalorder %s162, %s163
    %p172 = scmp.eq.s32.totalorder %s21, 0
    %p173 = por %p171, %p172
    %p174 = scmp.ne.s32.totalorder %s162, %s163
    %p175 = scmp.eq.s32.totalorder %s22, 1
    %p176 = por %p174, %p175
    %p178 = scmp.ne.s32.totalorder %s163, %s177
    %p179 = scmp.eq.s32.totalorder %s22, 0
    %p180 = por %p178, %p179
    %s182 = sadd.s32 %s181, 1
    %p185 = scmp.eq.s32.totalorder %s16, 1
    %p186 = scmp.ne.s32.totalorder %s181, %s183
    %p187 = scmp.eq.s32.totalorder %s16, 0
    %p188 = por %p186, %p187
    %p189 = scmp.ne.s32.totalorder %s181, %s183
    %p190 = scmp.eq.s32.totalorder %s21, 1
    %p191 = por %p189, %p190
    %p192 = scmp.ne.s32.totalorder %s183, %s184
    %p193 = scmp.eq.s32.totalorder %s21, 0
    %p194 = por %p192, %p193
    %p195 = scmp.ne.s32.totalorder %s183, %s184
    %p196 = scmp.eq.s32.totalorder %s22, 1
    %p197 = por %p195, %p196
    %p199 = scmp.ne.s32.totalorder %s184, %s198
    %p200 = scmp.eq.s32.totalorder %s22, 0
    %p201 = por %p199, %p200
    %s202 = ssub.s32 %s16, %s23
    %p203 = scmp.eq.s32.totalorder %s202, 0
    %s205 = sadd.s32 %s204, 1
    %s206 = scalar_select %p203, %s204, %s205
    %p209 = pneg %p203
    %p210 = scmp.eq.s32.totalorder %s16, 1
    %p211 = por %p209, %p210
    %p212 = scmp.ne.s32.totalorder %s204, %s207
    %p213 = scmp.eq.s32.totalorder %s16, 0
    %p214 = por %p212, %p213
    %p215 = scmp.ne.s32.totalorder %s204, %s207
    %p216 = scmp.eq.s32.totalorder %s21, 1
    %p217 = por %p215, %p216
    %p218 = scmp.ne.s32.totalorder %s207, %s208
    %p219 = scmp.eq.s32.totalorder %s21, 0
    %p220 = por %p218, %p219
    %p221 = scmp.ne.s32.totalorder %s207, %s208
    %p222 = scmp.eq.s32.totalorder %s22, 1
    %p223 = por %p221, %p222
    %p225 = scmp.ne.s32.totalorder %s208, %s224
    %p226 = scmp.eq.s32.totalorder %s22, 0
    %p227 = por %p225, %p226
    %p228 = scmp.le.s32.totalorder 1, %s16
    %p229 = scmp.lt.s32.totalorder %s16, 3
    %p230 = pnand %p228, %p229
    %p231 = pneg %p230
    // Predicated region
    $region9: #{tpu_custom_call.1} parent=5 // pred_check
      _
    $region10: #{tpu_custom_call.1} parent=5 // pred_check_branch
      %233 = sbr.rel (%p230) target = $region12
    $region11: #{tpu_custom_call.1} parent=5 // pred_region
      %s234 = ssub.s32 %s16, 1
      // Predicated region
      $region13: #{tpu_custom_call.1} parent=11 // pred_check
        %p235 = pneg %p89
      $region14: #{tpu_custom_call.1} parent=11 // pred_check_branch
        %237 = sbr.rel (%p235) target = $region16
      $region15: #{tpu_custom_call.1} parent=11 // pred_region
        _
      $region16: #{tpu_custom_call.1} parent=11 // pred_fallthru
        _
      // Predicated region
      $region17: #{tpu_custom_call.1} parent=11 // pred_check
        %p238 = pneg %p110
      $region18: #{tpu_custom_call.1} parent=11 // pred_check_branch
        %240 = sbr.rel (%p238) target = $region20
      $region19: #{tpu_custom_call.1} parent=11 // pred_region
        _
      $region20: #{tpu_custom_call.1} parent=11 // pred_fallthru
        _
      // Predicated region
      $region21: #{tpu_custom_call.1} parent=11 // pred_check
        %p241 = pneg %p131
      $region22: #{tpu_custom_call.1} parent=11 // pred_check_branch
        %243 = sbr.rel (%p241) target = $region24
      $region23: #{tpu_custom_call.1} parent=11 // pred_region
        _
      $region24: #{tpu_custom_call.1} parent=11 // pred_fallthru
        _
      // Predicated region
      $region25: #{tpu_custom_call.1} parent=11 // pred_check
        %p244 = pneg %p152
      $region26: #{tpu_custom_call.1} parent=11 // pred_check_branch
        %246 = sbr.rel (%p244) target = $region28
      $region27: #{tpu_custom_call.1} parent=11 // pred_region
        _
      $region28: #{tpu_custom_call.1} parent=11 // pred_fallthru
        _
      // Predicated region
      $region29: #{tpu_custom_call.1} parent=11 // pred_check
        %p247 = pneg %p173
      $region30: #{tpu_custom_call.1} parent=11 // pred_check_branch
        %249 = sbr.rel (%p247) target = $region32
      $region31: #{tpu_custom_call.1} parent=11 // pred_region
        _
      $region32: #{tpu_custom_call.1} parent=11 // pred_fallthru
        _
      // Predicated region
      $region33: #{tpu_custom_call.1} parent=11 // pred_check
        %p250 = pneg %p194
      $region34: #{tpu_custom_call.1} parent=11 // pred_check_branch
        %252 = sbr.rel (%p250) target = $region36
      $region35: #{tpu_custom_call.1} parent=11 // pred_region
        _
      $region36: #{tpu_custom_call.1} parent=11 // pred_fallthru
        _
    $region12: #{tpu_custom_call.1} parent=5 // pred_fallthru
      _
    %p253 = scmp.lt.s32.totalorder %s16, 2
    // Predicated region
    $region37: #{tpu_custom_call.1} parent=5 // pred_check
      %p254 = pneg %p253
    $region38: #{tpu_custom_call.1} parent=5 // pred_check_branch
      %256 = sbr.rel (%p254) target = $region40
    $region39: #{tpu_custom_call.1} parent=5 // pred_region
      // Predicated region
      $region41: #{tpu_custom_call.1} parent=39 // pred_check
        %p257 = pneg %p36
      $region42: #{tpu_custom_call.1} parent=39 // pred_check_branch
        %259 = sbr.rel (%p257) target = $region44
      $region43: #{tpu_custom_call.1} parent=39 // pred_region
        %s260 = smul.u32 32, %s16
        %p261 = scmp.lt.s32.totalorder %s260, 63
        %s262 = scalar_select %p261, %s260, 63
        %s263 = smul.addr %s262, 4
        %s264 = scalar_lea.vmem %s0, %s263
        %s265 = smul.u32 32, %s16
      $region44: #{tpu_custom_call.1} parent=39 // pred_fallthru
        _
      // Predicated region
      $region45: #{tpu_custom_call.1} parent=39 // pred_check
        %p266 = pneg %p62
      $region46: #{tpu_custom_call.1} parent=39 // pred_check_branch
        %268 = sbr.rel (%p266) target = $region48
      $region47: #{tpu_custom_call.1} parent=39 // pred_region
        %s269 = smul.u32 32, %s16
        %p270 = scmp.lt.s32.totalorder %s269, 63
        %s271 = scalar_select %p270, %s269, 63
        %s272 = smul.addr %s271, 4
        %s273 = scalar_lea.vmem %s1, %s272
        %s274 = smul.u32 32, %s16
      $region48: #{tpu_custom_call.1} parent=39 // pred_fallthru
        _
    $region40: #{tpu_custom_call.1} parent=5 // pred_fallthru
      _
    %p275 = scmp.le.s32.totalorder 1, %s16
    %p276 = scmp.lt.s32.totalorder %s16, 3
    %p277 = pnand %p275, %p276
    %p278 = pneg %p277
    // Predicated region
    $region49: #{tpu_custom_call.1} parent=5 // pred_check
      _
    $region50: #{tpu_custom_call.1} parent=5 // pred_check_branch
      %280 = sbr.rel (%p277) target = $region52
    $region51: #{tpu_custom_call.1} parent=5 // pred_region
      %s281 = ssub.s32 %s16, 1
      %s282 = smul.u32 32, %s21
      %p283 = scmp.lt.s32.totalorder %s282, 63
      %s284 = scalar_select %p283, %s282, 63
      %s285 = smul.addr %s284, 4
      %s286 = scalar_lea.vmem %s0, %s285
      %p287 = pneg %p42
      %p288 = pneg %p39
      %s289 = smul.u32 32, %s21
      %p290 = scmp.lt.s32.totalorder %s289, 63
      %s291 = scalar_select %p290, %s289, 63
      %s292 = smul.addr %s291, 4
      %s293 = scalar_lea.vmem %s1, %s292
      %p294 = pneg %p68
      %p295 = pneg %p65
      %p296 = pneg %p89
      %p297 = pneg %p86
      %p298 = pneg %p110
      %p299 = pneg %p107
      %p300 = pneg %p131
      %p301 = pneg %p128
      %p302 = pneg %p152
      %p303 = pneg %p149
      %p304 = pneg %p173
      %p305 = pneg %p170
      %p306 = pneg %p194
      %p307 = pneg %p191
      %p308 = pneg %p220
      %p309 = pneg %p217
      %s310 = smul.u32 32, %s21
      %p311 = scmp.lt.s32.totalorder %s310, 63
      %s312 = scalar_select %p311, %s310, 63
      %s313 = smul.addr %s312, 8
      %s314 = scalar_lea.vmem %s8, %s313
      %s315 = smul.u32 32, %s21
      %p316 = scmp.lt.s32.totalorder %s315, 63
      %s317 = scalar_select %p316, %s315, 63
      %s318 = smul.addr %s317, 4
      %s319 = scalar_lea.vmem %s0, %s318
      %s320 = smul.u32 32, %s21
      %s321 = smul.u32 32, %s21
      %p322 = scmp.lt.s32.totalorder %s321, 63
      %s323 = scalar_select %p322, %s321, 63
      %s324 = smul.addr %s323, 4
      %s325 = scalar_lea.vmem %s1, %s324
      %s326 = smul.u32 32, %s21
      %s327 = smul.u32 32, %s21
      %p328 = scmp.lt.s32.totalorder %s327, 63
      %s329 = scalar_select %p328, %s327, 63
      %s330 = smul.addr %s329, 8
      %s331 = scalar_lea.vmem %s8, %s330
      %s332 = smul.u32 32, %s21
      %v334 = vld [vmem:[%s319] sm:$0xf]
      %v335 = vld [vmem:[%s319 + $0x4] sm:$0xf]
      %v336 = vld [vmem:[%s319 + $0x8] sm:$0xf]
      %v337 = vld [vmem:[%s319 + $0xc] sm:$0xf]
      %v338 = vld [vmem:[%s319 + $0x10] sm:$0xf]
      %v339 = vld [vmem:[%s319 + $0x14] sm:$0xf]
      %v340 = vld [vmem:[%s319 + $0x18] sm:$0xf]
      %v341 = vld [vmem:[%s319 + $0x1c] sm:$0xf]
      %v342 = vld [vmem:[%s319 + $0x20] sm:$0xf]
      %v343 = vld [vmem:[%s319 + $0x24] sm:$0xf]
      %v344 = vld [vmem:[%s319 + $0x28] sm:$0xf]
      %v345 = vld [vmem:[%s319 + $0x2c] sm:$0xf]
      %v346 = vld [vmem:[%s319 + $0x30] sm:$0xf]
      %v347 = vld [vmem:[%s319 + $0x34] sm:$0xf]
      %v348 = vld [vmem:[%s319 + $0x38] sm:$0xf]
      %v349 = vld [vmem:[%s319 + $0x3c] sm:$0xf]
      %v350 = vld [vmem:[%s319 + $0x40] sm:$0xf]
      %v351 = vld [vmem:[%s319 + $0x44] sm:$0xf]
      %v352 = vld [vmem:[%s319 + $0x48] sm:$0xf]
      %v353 = vld [vmem:[%s319 + $0x4c] sm:$0xf]
      %v354 = vld [vmem:[%s319 + $0x50] sm:$0xf]
      %v355 = vld [vmem:[%s319 + $0x54] sm:$0xf]
      %v356 = vld [vmem:[%s319 + $0x58] sm:$0xf]
      %v357 = vld [vmem:[%s319 + $0x5c] sm:$0xf]
      %v358 = vld [vmem:[%s319 + $0x60] sm:$0xf]
      %v359 = vld [vmem:[%s319 + $0x64] sm:$0xf]
      %v360 = vld [vmem:[%s319 + $0x68] sm:$0xf]
      %v361 = vld [vmem:[%s319 + $0x6c] sm:$0xf]
      %v362 = vld [vmem:[%s319 + $0x70] sm:$0xf]
      %v363 = vld [vmem:[%s319 + $0x74] sm:$0xf]
      %v364 = vld [vmem:[%s319 + $0x78] sm:$0xf]
      %v365 = vld [vmem:[%s319 + $0x7c] sm:$0xf]
      %v366 = vld [vmem:[%s325] sm:$0xf]
      %v367 = vld [vmem:[%s325 + $0x4] sm:$0xf]
      %v368 = vld [vmem:[%s325 + $0x8] sm:$0xf]
      %v369 = vld [vmem:[%s325 + $0xc] sm:$0xf]
      %v370 = vld [vmem:[%s325 + $0x10] sm:$0xf]
      %v371 = vld [vmem:[%s325 + $0x14] sm:$0xf]
      %v372 = vld [vmem:[%s325 + $0x18] sm:$0xf]
      %v373 = vld [vmem:[%s325 + $0x1c] sm:$0xf]
      %v374 = vld [vmem:[%s325 + $0x20] sm:$0xf]
      %v375 = vld [vmem:[%s325 + $0x24] sm:$0xf]
      %v376 = vld [vmem:[%s325 + $0x28] sm:$0xf]
      %v377 = vld [vmem:[%s325 + $0x2c] sm:$0xf]
      %v378 = vld [vmem:[%s325 + $0x30] sm:$0xf]
      %v379 = vld [vmem:[%s325 + $0x34] sm:$0xf]
      %v380 = vld [vmem:[%s325 + $0x38] sm:$0xf]
      %v381 = vld [vmem:[%s325 + $0x3c] sm:$0xf]
      %v382 = vld [vmem:[%s325 + $0x40] sm:$0xf]
      %v383 = vld [vmem:[%s325 + $0x44] sm:$0xf]
      %v384 = vld [vmem:[%s325 + $0x48] sm:$0xf]
      %v385 = vld [vmem:[%s325 + $0x4c] sm:$0xf]
      %v386 = vld [vmem:[%s325 + $0x50] sm:$0xf]
      %v387 = vld [vmem:[%s325 + $0x54] sm:$0xf]
      %v388 = vld [vmem:[%s325 + $0x58] sm:$0xf]
      %v389 = vld [vmem:[%s325 + $0x5c] sm:$0xf]
      %v390 = vld [vmem:[%s325 + $0x60] sm:$0xf]
      %v391 = vld [vmem:[%s325 + $0x64] sm:$0xf]
      %v392 = vld [vmem:[%s325 + $0x68] sm:$0xf]
      %v393 = vld [vmem:[%s325 + $0x6c] sm:$0xf]
      %v394 = vld [vmem:[%s325 + $0x70] sm:$0xf]
      %v395 = vld [vmem:[%s325 + $0x74] sm:$0xf]
      %v396 = vld [vmem:[%s325 + $0x78] sm:$0xf]
      %v397 = vld [vmem:[%s325 + $0x7c] sm:$0xf]
      %v398 = vld [vmem:[%s2] sm:$0xf]
      %v399 = vld [vmem:[%s2 + $0x4] sm:$0xf]
      %v400 = vld [vmem:[%s2 + $0x8] sm:$0xf]
      %v401 = vld [vmem:[%s2 + $0xc] sm:$0xf]
      %v402 = vld [vmem:[%s4] sm:$0x1]
      %v404 = vlaneseq
      %v405 = vshrl.u32 %v404, 7
      %v406 = vsub.s32 0, %v405
      %v407 = vrot.slane %v402, %v406
      %v441 = vunpack.c.l.b16 %v334
      %v442 = vunpack.c.l.b16 %v335
      %v443 = vunpack.c.l.b16 %v336
      %v444 = vunpack.c.l.b16 %v337
      %v445 = vunpack.c.l.b16 %v338
      %v446 = vunpack.c.l.b16 %v339
      %v447 = vunpack.c.l.b16 %v340
      %v448 = vunpack.c.l.b16 %v341
      %v449 = vunpack.c.l.b16 %v342
      %v450 = vunpack.c.l.b16 %v343
      %v451 = vunpack.c.l.b16 %v344
      %v452 = vunpack.c.l.b16 %v345
      %v453 = vunpack.c.l.b16 %v346
      %v454 = vunpack.c.l.b16 %v347
      %v455 = vunpack.c.l.b16 %v348
      %v456 = vunpack.c.l.b16 %v349
      %v457 = vunpack.c.l.b16 %v350
      %v458 = vunpack.c.l.b16 %v351
      %v459 = vunpack.c.l.b16 %v352
      %v460 = vunpack.c.l.b16 %v353
      %v461 = vunpack.c.l.b16 %v354
      %v462 = vunpack.c.l.b16 %v355
      %v463 = vunpack.c.l.b16 %v356
      %v464 = vunpack.c.l.b16 %v357
      %v465 = vunpack.c.l.b16 %v358
      %v466 = vunpack.c.l.b16 %v359
      %v467 = vunpack.c.l.b16 %v360
      %v468 = vunpack.c.l.b16 %v361
      %v469 = vunpack.c.l.b16 %v362
      %v470 = vunpack.c.l.b16 %v363
      %v471 = vunpack.c.l.b16 %v364
      %v472 = vunpack.c.l.b16 %v365
      %v473 = vpack.c.b16 %v442, %v441
      %v474 = vpack.c.b16 %v444, %v443
      %v475 = vpack.c.b16 %v446, %v445
      %v476 = vpack.c.b16 %v448, %v447
      %v477 = vpack.c.b16 %v450, %v449
      %v478 = vpack.c.b16 %v452, %v451
      %v479 = vpack.c.b16 %v454, %v453
      %v480 = vpack.c.b16 %v456, %v455
      %v481 = vpack.c.b16 %v458, %v457
      %v482 = vpack.c.b16 %v460, %v459
      %v483 = vpack.c.b16 %v462, %v461
      %v484 = vpack.c.b16 %v464, %v463
      %v485 = vpack.c.b16 %v466, %v465
      %v486 = vpack.c.b16 %v468, %v467
      %v487 = vpack.c.b16 %v470, %v469
      %v488 = vpack.c.b16 %v472, %v471
      %v493 = vunpack.c.l.b16 %v398
      %v494 = vunpack.c.l.b16 %v399
      %v495 = vunpack.c.l.b16 %v400
      %v496 = vunpack.c.l.b16 %v401
      %v497 = vpack.c.b16 %v494, %v493
      %v498 = vpack.c.b16 %v496, %v495
      %vm501 = vcmask 261120
      %v503 = vsel %vm501, %v473, 0
      %v506 = vsel %vm501, %v474, 0
      %v509 = vsel %vm501, %v475, 0
      %v512 = vsel %vm501, %v476, 0
      %v515 = vsel %vm501, %v477, 0
      %v518 = vsel %vm501, %v478, 0
      %v521 = vsel %vm501, %v479, 0
      %v524 = vsel %vm501, %v480, 0
      %v527 = vsel %vm501, %v481, 0
      %v530 = vsel %vm501, %v482, 0
      %v533 = vsel %vm501, %v483, 0
      %v536 = vsel %vm501, %v484, 0
      %v539 = vsel %vm501, %v485, 0
      %v542 = vsel %vm501, %v486, 0
      %v545 = vsel %vm501, %v487, 0
      %v548 = vsel %vm501, %v488, 0
      %550 = vmatprep.subr.bf16.mxu0 0
      %551 = vmatpush1.bf16.msra.mxu0 %v497
      %552 = vmatprep.subr.bf16.mxu0 0
      %553 = vmatpush1.bf16.msra.mxu0 %v498
      %554 = vmatprep.subr.bf16.mxu0 0
      %555 = vmatpush1.bf16.msra.mxu0 0
      %556 = vmatprep.subr.bf16.mxu0 0
      %557 = vmatpush1.bf16.msra.mxu0 0
      %558 = vmatprep.subr.bf16.mxu0 0
      %559 = vmatpush1.bf16.msra.mxu0 0
      %560 = vmatprep.subr.bf16.mxu0 0
      %561 = vmatpush1.bf16.msra.mxu0 0
      %562 = vmatprep.subr.bf16.mxu0 0
      %563 = vmatpush1.bf16.msra.mxu0 0
      %564 = vmatprep.subr.bf16.mxu0 0
      %565 = vmatpush1.bf16.msra.mxu0 0
      %566 = vmatprep.subr.bf16.mxu0 0
      %567 = vmatpush1.bf16.msra.mxu0 0
      %568 = vmatprep.subr.bf16.mxu0 0
      %569 = vmatpush1.bf16.msra.mxu0 0
      %570 = vmatprep.subr.bf16.mxu0 0
      %571 = vmatpush1.bf16.msra.mxu0 0
      %572 = vmatprep.subr.bf16.mxu0 0
      %573 = vmatpush1.bf16.msra.mxu0 0
      %574 = vmatprep.subr.bf16.mxu0 0
      %575 = vmatpush1.bf16.msra.mxu0 0
      %576 = vmatprep.subr.bf16.mxu0 0
      %577 = vmatpush1.bf16.msra.mxu0 0
      %578 = vmatprep.subr.bf16.mxu0 0
      %579 = vmatpush1.bf16.msra.mxu0 0
      %580 = vmatprep.subr.bf16.mxu0 0
      %581 = vmatpush1.bf16.msra.mxu0 0
      %582 = vmatprep.mubr.bf16.mxu0 0
      %583 = vmatmul.mubr.bf16.gmra.mrb[0].mxu0 %v503
      %v584 = vpop.f32.mrb[0].mxu0
      %v585 = vadd.f32 %v407, %v584
      %v586 = vpop.f32.mrb[0].mxu0
      %v587 = vpop.f32.mrb[0].mxu0
      %v588 = vadd.f32 %v407, %v587
      %v589 = vpop.f32.mrb[0].mxu0
      %590 = vmatprep.mubr.bf16.mxu0 0
      %591 = vmatmul.mubr.bf16.gmra.mrb[0].mxu0 %v506
      %v592 = vpop.f32.mrb[0].mxu0
      %v593 = vadd.f32 %v407, %v592
      %v594 = vpop.f32.mrb[0].mxu0
      %v595 = vpop.f32.mrb[0].mxu0
      %v596 = vadd.f32 %v407, %v595
      %v597 = vpop.f32.mrb[0].mxu0
      %598 = vmatprep.mubr.bf16.mxu0 0
      %599 = vmatmul.mubr.bf16.gmra.mrb[0].mxu0 %v509
      %v600 = vpop.f32.mrb[0].mxu0
      %v601 = vadd.f32 %v407, %v600
      %v602 = vpop.f32.mrb[0].mxu0
      %v603 = vpop.f32.mrb[0].mxu0
      %v604 = vadd.f32 %v407, %v603
      %v605 = vpop.f32.mrb[0].mxu0
      %606 = vmatprep.mubr.bf16.mxu0 0
      %607 = vmatmul.mubr.bf16.gmra.mrb[0].mxu0 %v512
      %v608 = vpop.f32.mrb[0].mxu0
      %v609 = vadd.f32 %v407, %v608
      %v610 = vpop.f32.mrb[0].mxu0
      %v611 = vpop.f32.mrb[0].mxu0
      %v612 = vadd.f32 %v407, %v611
      %v613 = vpop.f32.mrb[0].mxu0
      %614 = vmatprep.mubr.bf16.mxu0 0
      %615 = vmatmul.mubr.bf16.gmra.mrb[0].mxu0 %v515
      %v616 = vpop.f32.mrb[0].mxu0
      %v617 = vadd.f32 %v407, %v616
      %v618 = vpop.f32.mrb[0].mxu0
      %v619 = vpop.f32.mrb[0].mxu0
      %v620 = vadd.f32 %v407, %v619
      %v621 = vpop.f32.mrb[0].mxu0
      %622 = vmatprep.mubr.bf16.mxu0 0
      %623 = vmatmul.mubr.bf16.gmra.mrb[0].mxu0 %v518
      %v624 = vpop.f32.mrb[0].mxu0
      %v625 = vadd.f32 %v407, %v624
      %v626 = vpop.f32.mrb[0].mxu0
      %v627 = vpop.f32.mrb[0].mxu0
      %v628 = vadd.f32 %v407, %v627
      %v629 = vpop.f32.mrb[0].mxu0
      %630 = vmatprep.mubr.bf16.mxu0 0
      %631 = vmatmul.mubr.bf16.gmra.mrb[0].mxu0 %v521
      %v632 = vpop.f32.mrb[0].mxu0
      %v633 = vadd.f32 %v407, %v632
      %v634 = vpop.f32.mrb[0].mxu0
      %v635 = vpop.f32.mrb[0].mxu0
      %v636 = vadd.f32 %v407, %v635
      %v637 = vpop.f32.mrb[0].mxu0
      %638 = vmatprep.mubr.bf16.mxu0 0
      %639 = vmatmul.mubr.bf16.gmra.mrb[0].mxu0 %v524
      %v640 = vpop.f32.mrb[0].mxu0
      %v641 = vadd.f32 %v407, %v640
      %v642 = vpop.f32.mrb[0].mxu0
      %v643 = vpop.f32.mrb[0].mxu0
      %v644 = vadd.f32 %v407, %v643
      %v645 = vpop.f32.mrb[0].mxu0
      %646 = vmatprep.mubr.bf16.mxu0 0
      %647 = vmatmul.mubr.bf16.gmra.mrb[0].mxu0 %v527
      %v648 = vpop.f32.mrb[0].mxu0
      %v649 = vadd.f32 %v407, %v648
      %v650 = vpop.f32.mrb[0].mxu0
      %v651 = vpop.f32.mrb[0].mxu0
      %v652 = vadd.f32 %v407, %v651
      %v653 = vpop.f32.mrb[0].mxu0
      %654 = vmatprep.mubr.bf16.mxu0 0
      %655 = vmatmul.mubr.bf16.gmra.mrb[0].mxu0 %v530
      %v656 = vpop.f32.mrb[0].mxu0
      %v657 = vadd.f32 %v407, %v656
      %v658 = vpop.f32.mrb[0].mxu0
      %v659 = vpop.f32.mrb[0].mxu0
      %v660 = vadd.f32 %v407, %v659
      %v661 = vpop.f32.mrb[0].mxu0
      %662 = vmatprep.mubr.bf16.mxu0 0
      %663 = vmatmul.mubr.bf16.gmra.mrb[0].mxu0 %v533
      %v664 = vpop.f32.mrb[0].mxu0
      %v665 = vadd.f32 %v407, %v664
      %v666 = vpop.f32.mrb[0].mxu0
      %v667 = vpop.f32.mrb[0].mxu0
      %v668 = vadd.f32 %v407, %v667
      %v669 = vpop.f32.mrb[0].mxu0
      %670 = vmatprep.mubr.bf16.mxu0 0
      %671 = vmatmul.mubr.bf16.gmra.mrb[0].mxu0 %v536
      %v672 = vpop.f32.mrb[0].mxu0
      %v673 = vadd.f32 %v407, %v672
      %v674 = vpop.f32.mrb[0].mxu0
      %v675 = vpop.f32.mrb[0].mxu0
      %v676 = vadd.f32 %v407, %v675
      %v677 = vpop.f32.mrb[0].mxu0
      %678 = vmatprep.mubr.bf16.mxu0 0
      %679 = vmatmul.mubr.bf16.gmra.mrb[0].mxu0 %v539
      %v680 = vpop.f32.mrb[0].mxu0
      %v681 = vadd.f32 %v407, %v680
      %v682 = vpop.f32.mrb[0].mxu0
      %v683 = vpop.f32.mrb[0].mxu0
      %v684 = vadd.f32 %v407, %v683
      %v685 = vpop.f32.mrb[0].mxu0
      %686 = vmatprep.mubr.bf16.mxu0 0
      %687 = vmatmul.mubr.bf16.gmra.mrb[0].mxu0 %v542
      %v688 = vpop.f32.mrb[0].mxu0
      %v689 = vadd.f32 %v407, %v688
      %v690 = vpop.f32.mrb[0].mxu0
      %v691 = vpop.f32.mrb[0].mxu0
      %v692 = vadd.f32 %v407, %v691
      %v693 = vpop.f32.mrb[0].mxu0
      %694 = vmatprep.mubr.bf16.mxu0 0
      %695 = vmatmul.mubr.bf16.gmra.mrb[0].mxu0 %v545
      %v696 = vpop.f32.mrb[0].mxu0
      %v697 = vadd.f32 %v407, %v696
      %v698 = vpop.f32.mrb[0].mxu0
      %v699 = vpop.f32.mrb[0].mxu0
      %v700 = vadd.f32 %v407, %v699
      %v701 = vpop.f32.mrb[0].mxu0
      %702 = vmatprep.mubr.bf16.mxu0 0
      %703 = vmatmul.mubr.bf16.gmra.mrb[0].mxu0 %v548
      %v704 = vpop.f32.mrb[0].mxu0
      %v705 = vadd.f32 %v407, %v704
      %v706 = vpop.f32.mrb[0].mxu0
      %v707 = vpop.f32.mrb[0].mxu0
      %v708 = vadd.f32 %v407, %v707
      %v709 = vpop.f32.mrb[0].mxu0
      %710 = vdwg.mxu0
      %v711 = vld [vmem:[%s3] sm:$0xf]
      %v712 = vld [vmem:[%s3 + $0x4] sm:$0xf]
      %v713 = vld [vmem:[%s3 + $0x8] sm:$0xf]
      %v714 = vld [vmem:[%s3 + $0xc] sm:$0xf]
      %v715 = vld [vmem:[%s5] sm:$0x1]
      %v717 = vlaneseq
      %v718 = vshrl.u32 %v717, 7
      %v719 = vsub.s32 0, %v718
      %v720 = vrot.slane %v715, %v719
      %v754 = vunpack.c.l.b16 %v366
      %v755 = vunpack.c.l.b16 %v367
      %v756 = vunpack.c.l.b16 %v368
      %v757 = vunpack.c.l.b16 %v369
      %v758 = vunpack.c.l.b16 %v370
      %v759 = vunpack.c.l.b16 %v371
      %v760 = vunpack.c.l.b16 %v372
      %v761 = vunpack.c.l.b16 %v373
      %v762 = vunpack.c.l.b16 %v374
      %v763 = vunpack.c.l.b16 %v375
      %v764 = vunpack.c.l.b16 %v376
      %v765 = vunpack.c.l.b16 %v377
      %v766 = vunpack.c.l.b16 %v378
      %v767 = vunpack.c.l.b16 %v379
      %v768 = vunpack.c.l.b16 %v380
      %v769 = vunpack.c.l.b16 %v381
      %v770 = vunpack.c.l.b16 %v382
      %v771 = vunpack.c.l.b16 %v383
      %v772 = vunpack.c.l.b16 %v384
      %v773 = vunpack.c.l.b16 %v385
      %v774 = vunpack.c.l.b16 %v386
      %v775 = vunpack.c.l.b16 %v387
      %v776 = vunpack.c.l.b16 %v388
      %v777 = vunpack.c.l.b16 %v389
      %v778 = vunpack.c.l.b16 %v390
      %v779 = vunpack.c.l.b16 %v391
      %v780 = vunpack.c.l.b16 %v392
      %v781 = vunpack.c.l.b16 %v393
      %v782 = vunpack.c.l.b16 %v394
      %v783 = vunpack.c.l.b16 %v395
      %v784 = vunpack.c.l.b16 %v396
      %v785 = vunpack.c.l.b16 %v397
      %v786 = vpack.c.b16 %v755, %v754
      %v787 = vpack.c.b16 %v757, %v756
      %v788 = vpack.c.b16 %v759, %v758
      %v789 = vpack.c.b16 %v761, %v760
      %v790 = vpack.c.b16 %v763, %v762
      %v791 = vpack.c.b16 %v765, %v764
      %v792 = vpack.c.b16 %v767, %v766
      %v793 = vpack.c.b16 %v769, %v768
      %v794 = vpack.c.b16 %v771, %v770
      %v795 = vpack.c.b16 %v773, %v772
      %v796 = vpack.c.b16 %v775, %v774
      %v797 = vpack.c.b16 %v777, %v776
      %v798 = vpack.c.b16 %v779, %v778
      %v799 = vpack.c.b16 %v781, %v780
      %v800 = vpack.c.b16 %v783, %v782
      %v801 = vpack.c.b16 %v785, %v784
      %v806 = vunpack.c.l.b16 %v711
      %v807 = vunpack.c.l.b16 %v712
      %v808 = vunpack.c.l.b16 %v713
      %v809 = vunpack.c.l.b16 %v714
      %v810 = vpack.c.b16 %v807, %v806
      %v811 = vpack.c.b16 %v809, %v808
      %v815 = vsel %vm501, %v786, 0
      %v818 = vsel %vm501, %v787, 0
      %v821 = vsel %vm501, %v788, 0
      %v824 = vsel %vm501, %v789, 0
      %v827 = vsel %vm501, %v790, 0
      %v830 = vsel %vm501, %v791, 0
      %v833 = vsel %vm501, %v792, 0
      %v836 = vsel %vm501, %v793, 0
      %v839 = vsel %vm501, %v794, 0
      %v842 = vsel %vm501, %v795, 0
      %v845 = vsel %vm501, %v796, 0
      %v848 = vsel %vm501, %v797, 0
      %v851 = vsel %vm501, %v798, 0
      %v854 = vsel %vm501, %v799, 0
      %v857 = vsel %vm501, %v800, 0
      %v860 = vsel %vm501, %v801, 0
      %862 = vmatprep.subr.bf16.mxu0 0
      %863 = vmatpush1.bf16.msra.mxu0 %v810
      %864 = vmatprep.subr.bf16.mxu0 0
      %865 = vmatpush1.bf16.msra.mxu0 %v811
      %866 = vmatprep.subr.bf16.mxu0 0
      %867 = vmatpush1.bf16.msra.mxu0 0
      %868 = vmatprep.subr.bf16.mxu0 0
      %869 = vmatpush1.bf16.msra.mxu0 0
      %870 = vmatprep.subr.bf16.mxu0 0
      %871 = vmatpush1.bf16.msra.mxu0 0
      %872 = vmatprep.subr.bf16.mxu0 0
      %873 = vmatpush1.bf16.msra.mxu0 0
      %874 = vmatprep.subr.bf16.mxu0 0
      %875 = vmatpush1.bf16.msra.mxu0 0
      %876 = vmatprep.subr.bf16.mxu0 0
      %877 = vmatpush1.bf16.msra.mxu0 0
      %878 = vmatprep.subr.bf16.mxu0 0
      %879 = vmatpush1.bf16.msra.mxu0 0
      %880 = vmatprep.subr.bf16.mxu0 0
      %881 = vmatpush1.bf16.msra.mxu0 0
      %882 = vmatprep.subr.bf16.mxu0 0
      %883 = vmatpush1.bf16.msra.mxu0 0
      %884 = vmatprep.subr.bf16.mxu0 0
      %885 = vmatpush1.bf16.msra.mxu0 0
      %886 = vmatprep.subr.bf16.mxu0 0
      %887 = vmatpush1.bf16.msra.mxu0 0
      %888 = vmatprep.subr.bf16.mxu0 0
      %889 = vmatpush1.bf16.msra.mxu0 0
      %890 = vmatprep.subr.bf16.mxu0 0
      %891 = vmatpush1.bf16.msra.mxu0 0
      %892 = vmatprep.subr.bf16.mxu0 0
      %893 = vmatpush1.bf16.msra.mxu0 0
      %894 = vmatprep.mubr.bf16.mxu0 0
      %895 = vmatmul.mubr.bf16.gmra.mrb[0].mxu0 %v815
      %v896 = vpop.f32.mrb[0].mxu0
      %v897 = vadd.f32 %v720, %v896
      %v898 = vpop.f32.mrb[0].mxu0
      %v899 = vpop.f32.mrb[0].mxu0
      %v900 = vadd.f32 %v720, %v899
      %v901 = vpop.f32.mrb[0].mxu0
      %902 = vmatprep.mubr.bf16.mxu0 0
      %903 = vmatmul.mubr.bf16.gmra.mrb[0].mxu0 %v818
      %v904 = vpop.f32.mrb[0].mxu0
      %v905 = vadd.f32 %v720, %v904
      %v906 = vpop.f32.mrb[0].mxu0
      %v907 = vpop.f32.mrb[0].mxu0
      %v908 = vadd.f32 %v720, %v907
      %v909 = vpop.f32.mrb[0].mxu0
      %910 = vmatprep.mubr.bf16.mxu0 0
      %911 = vmatmul.mubr.bf16.gmra.mrb[0].mxu0 %v821
      %v912 = vpop.f32.mrb[0].mxu0
      %v913 = vadd.f32 %v720, %v912
      %v914 = vpop.f32.mrb[0].mxu0
      %v915 = vpop.f32.mrb[0].mxu0
      %v916 = vadd.f32 %v720, %v915
      %v917 = vpop.f32.mrb[0].mxu0
      %918 = vmatprep.mubr.bf16.mxu0 0
      %919 = vmatmul.mubr.bf16.gmra.mrb[0].mxu0 %v824
      %v920 = vpop.f32.mrb[0].mxu0
      %v921 = vadd.f32 %v720, %v920
      %v922 = vpop.f32.mrb[0].mxu0
      %v923 = vpop.f32.mrb[0].mxu0
      %v924 = vadd.f32 %v720, %v923
      %v925 = vpop.f32.mrb[0].mxu0
      %926 = vmatprep.mubr.bf16.mxu0 0
      %927 = vmatmul.mubr.bf16.gmra.mrb[0].mxu0 %v827
      %v928 = vpop.f32.mrb[0].mxu0
      %v929 = vadd.f32 %v720, %v928
      %v930 = vpop.f32.mrb[0].mxu0
      %v931 = vpop.f32.mrb[0].mxu0
      %v932 = vadd.f32 %v720, %v931
      %v933 = vpop.f32.mrb[0].mxu0
      %934 = vmatprep.mubr.bf16.mxu0 0
      %935 = vmatmul.mubr.bf16.gmra.mrb[0].mxu0 %v830
      %v936 = vpop.f32.mrb[0].mxu0
      %v937 = vadd.f32 %v720, %v936
      %v938 = vpop.f32.mrb[0].mxu0
      %v939 = vpop.f32.mrb[0].mxu0
      %v940 = vadd.f32 %v720, %v939
      %v941 = vpop.f32.mrb[0].mxu0
      %942 = vmatprep.mubr.bf16.mxu0 0
      %943 = vmatmul.mubr.bf16.gmra.mrb[0].mxu0 %v833
      %v944 = vpop.f32.mrb[0].mxu0
      %v945 = vadd.f32 %v720, %v944
      %v946 = vpop.f32.mrb[0].mxu0
      %v947 = vpop.f32.mrb[0].mxu0
      %v948 = vadd.f32 %v720, %v947
      %v949 = vpop.f32.mrb[0].mxu0
      %950 = vmatprep.mubr.bf16.mxu0 0
      %951 = vmatmul.mubr.bf16.gmra.mrb[0].mxu0 %v836
      %v952 = vpop.f32.mrb[0].mxu0
      %v953 = vadd.f32 %v720, %v952
      %v954 = vpop.f32.mrb[0].mxu0
      %v955 = vpop.f32.mrb[0].mxu0
      %v956 = vadd.f32 %v720, %v955
      %v957 = vpop.f32.mrb[0].mxu0
      %958 = vmatprep.mubr.bf16.mxu0 0
      %959 = vmatmul.mubr.bf16.gmra.mrb[0].mxu0 %v839
      %v960 = vpop.f32.mrb[0].mxu0
      %v961 = vadd.f32 %v720, %v960
      %v962 = vpop.f32.mrb[0].mxu0
      %v963 = vpop.f32.mrb[0].mxu0
      %v964 = vadd.f32 %v720, %v963
      %v965 = vpop.f32.mrb[0].mxu0
      %966 = vmatprep.mubr.bf16.mxu0 0
      %967 = vmatmul.mubr.bf16.gmra.mrb[0].mxu0 %v842
      %v968 = vpop.f32.mrb[0].mxu0
      %v969 = vadd.f32 %v720, %v968
      %v970 = vpop.f32.mrb[0].mxu0
      %v971 = vpop.f32.mrb[0].mxu0
      %v972 = vadd.f32 %v720, %v971
      %v973 = vpop.f32.mrb[0].mxu0
      %974 = vmatprep.mubr.bf16.mxu0 0
      %975 = vmatmul.mubr.bf16.gmra.mrb[0].mxu0 %v845
      %v976 = vpop.f32.mrb[0].mxu0
      %v977 = vadd.f32 %v720, %v976
      %v978 = vpop.f32.mrb[0].mxu0
      %v979 = vpop.f32.mrb[0].mxu0
      %v980 = vadd.f32 %v720, %v979
      %v981 = vpop.f32.mrb[0].mxu0
      %982 = vmatprep.mubr.bf16.mxu0 0
      %983 = vmatmul.mubr.bf16.gmra.mrb[0].mxu0 %v848
      %v984 = vpop.f32.mrb[0].mxu0
      %v985 = vadd.f32 %v720, %v984
      %v986 = vpop.f32.mrb[0].mxu0
      %v987 = vpop.f32.mrb[0].mxu0
      %v988 = vadd.f32 %v720, %v987
      %v989 = vpop.f32.mrb[0].mxu0
      %990 = vmatprep.mubr.bf16.mxu0 0
      %991 = vmatmul.mubr.bf16.gmra.mrb[0].mxu0 %v851
      %v992 = vpop.f32.mrb[0].mxu0
      %v993 = vadd.f32 %v720, %v992
      %v994 = vpop.f32.mrb[0].mxu0
      %v995 = vpop.f32.mrb[0].mxu0
      %v996 = vadd.f32 %v720, %v995
      %v997 = vpop.f32.mrb[0].mxu0
      %998 = vmatprep.mubr.bf16.mxu0 0
      %999 = vmatmul.mubr.bf16.gmra.mrb[0].mxu0 %v854
      %v1000 = vpop.f32.mrb[0].mxu0
      %v1001 = vadd.f32 %v720, %v1000
      %v1002 = vpop.f32.mrb[0].mxu0
      %v1003 = vpop.f32.mrb[0].mxu0
      %v1004 = vadd.f32 %v720, %v1003
      %v1005 = vpop.f32.mrb[0].mxu0
      %1006 = vmatprep.mubr.bf16.mxu0 0
      %1007 = vmatmul.mubr.bf16.gmra.mrb[0].mxu0 %v857
      %v1008 = vpop.f32.mrb[0].mxu0
      %v1009 = vadd.f32 %v720, %v1008
      %v1010 = vpop.f32.mrb[0].mxu0
      %v1011 = vpop.f32.mrb[0].mxu0
      %v1012 = vadd.f32 %v720, %v1011
      %v1013 = vpop.f32.mrb[0].mxu0
      %1014 = vmatprep.mubr.bf16.mxu0 0
      %1015 = vmatmul.mubr.bf16.gmra.mrb[0].mxu0 %v860
      %v1016 = vpop.f32.mrb[0].mxu0
      %v1017 = vadd.f32 %v720, %v1016
      %v1018 = vpop.f32.mrb[0].mxu0
      %v1019 = vpop.f32.mrb[0].mxu0
      %v1020 = vadd.f32 %v720, %v1019
      %v1021 = vpop.f32.mrb[0].mxu0
      %1022 = vdwg.mxu0
      %v1023 = vadd.f32 %v585, %v897
      %v1024 = vadd.f32 %v588, %v900
      %v1025 = vadd.f32 %v593, %v905
      %v1026 = vadd.f32 %v596, %v908
      %v1027 = vadd.f32 %v601, %v913
      %v1028 = vadd.f32 %v604, %v916
      %v1029 = vadd.f32 %v609, %v921
      %v1030 = vadd.f32 %v612, %v924
      %v1031 = vadd.f32 %v617, %v929
      %v1032 = vadd.f32 %v620, %v932
      %v1033 = vadd.f32 %v625, %v937
      %v1034 = vadd.f32 %v628, %v940
      %v1035 = vadd.f32 %v633, %v945
      %v1036 = vadd.f32 %v636, %v948
      %v1037 = vadd.f32 %v641, %v953
      %v1038 = vadd.f32 %v644, %v956
      %v1039 = vadd.f32 %v649, %v961
      %v1040 = vadd.f32 %v652, %v964
      %v1041 = vadd.f32 %v657, %v969
      %v1042 = vadd.f32 %v660, %v972
      %v1043 = vadd.f32 %v665, %v977
      %v1044 = vadd.f32 %v668, %v980
      %v1045 = vadd.f32 %v673, %v985
      %v1046 = vadd.f32 %v676, %v988
      %v1047 = vadd.f32 %v681, %v993
      %v1048 = vadd.f32 %v684, %v996
      %v1049 = vadd.f32 %v689, %v1001
      %v1050 = vadd.f32 %v692, %v1004
      %v1051 = vadd.f32 %v697, %v1009
      %v1052 = vadd.f32 %v700, %v1012
      %v1053 = vadd.f32 %v705, %v1017
      %v1054 = vadd.f32 %v708, %v1020
      %v1055 = vmax.f32 %v1023, 0.0
      %v1056 = vmax.f32 %v1024, 0.0
      %v1057 = vmax.f32 %v1025, 0.0
      %v1058 = vmax.f32 %v1026, 0.0
      %v1059 = vmax.f32 %v1027, 0.0
      %v1060 = vmax.f32 %v1028, 0.0
      %v1061 = vmax.f32 %v1029, 0.0
      %v1062 = vmax.f32 %v1030, 0.0
      %v1063 = vmax.f32 %v1031, 0.0
      %v1064 = vmax.f32 %v1032, 0.0
      %v1065 = vmax.f32 %v1033, 0.0
      %v1066 = vmax.f32 %v1034, 0.0
      %v1067 = vmax.f32 %v1035, 0.0
      %v1068 = vmax.f32 %v1036, 0.0
      %v1069 = vmax.f32 %v1037, 0.0
      %v1070 = vmax.f32 %v1038, 0.0
      %v1071 = vmax.f32 %v1039, 0.0
      %v1072 = vmax.f32 %v1040, 0.0
      %v1073 = vmax.f32 %v1041, 0.0
      %v1074 = vmax.f32 %v1042, 0.0
      %v1075 = vmax.f32 %v1043, 0.0
      %v1076 = vmax.f32 %v1044, 0.0
      %v1077 = vmax.f32 %v1045, 0.0
      %v1078 = vmax.f32 %v1046, 0.0
      %v1079 = vmax.f32 %v1047, 0.0
      %v1080 = vmax.f32 %v1048, 0.0
      %v1081 = vmax.f32 %v1049, 0.0
      %v1082 = vmax.f32 %v1050, 0.0
      %v1083 = vmax.f32 %v1051, 0.0
      %v1084 = vmax.f32 %v1052, 0.0
      %v1085 = vmax.f32 %v1053, 0.0
      %v1086 = vmax.f32 %v1054, 0.0
      %v1087 = vld [vmem:[%s6] sm:$0x1]
      %v1089 = vlaneseq
      %v1090 = vshrl.u32 %v1089, 7
      %v1091 = vsub.s32 0, %v1090
      %v1092 = vrot.slane %v1087, %v1091
      %v1094 = vmul.f32 %v1055, %v1092
      %v1095 = vmul.f32 %v1056, %v1092
      %v1096 = vmul.f32 %v1057, %v1092
      %v1097 = vmul.f32 %v1058, %v1092
      %v1098 = vmul.f32 %v1059, %v1092
      %v1099 = vmul.f32 %v1060, %v1092
      %v1100 = vmul.f32 %v1061, %v1092
      %v1101 = vmul.f32 %v1062, %v1092
      %v1102 = vmul.f32 %v1063, %v1092
      %v1103 = vmul.f32 %v1064, %v1092
      %v1104 = vmul.f32 %v1065, %v1092
      %v1105 = vmul.f32 %v1066, %v1092
      %v1106 = vmul.f32 %v1067, %v1092
      %v1107 = vmul.f32 %v1068, %v1092
      %v1108 = vmul.f32 %v1069, %v1092
      %v1109 = vmul.f32 %v1070, %v1092
      %v1110 = vmul.f32 %v1071, %v1092
      %v1111 = vmul.f32 %v1072, %v1092
      %v1112 = vmul.f32 %v1073, %v1092
      %v1113 = vmul.f32 %v1074, %v1092
      %v1114 = vmul.f32 %v1075, %v1092
      %v1115 = vmul.f32 %v1076, %v1092
      %v1116 = vmul.f32 %v1077, %v1092
      %v1117 = vmul.f32 %v1078, %v1092
      %v1118 = vmul.f32 %v1079, %v1092
      %v1119 = vmul.f32 %v1080, %v1092
      %v1120 = vmul.f32 %v1081, %v1092
      %v1121 = vmul.f32 %v1082, %v1092
      %v1122 = vmul.f32 %v1083, %v1092
      %v1123 = vmul.f32 %v1084, %v1092
      %v1124 = vmul.f32 %v1085, %v1092
      %v1125 = vmul.f32 %v1086, %v1092
      %vm1126 = vcmask 130048
      %v1127 = vsel %vm1126, %v1094, 0.0
      %1128 = vadd.xlane.f32.xlu0 %v1127
      %v1129 = vpop.xlane.xlu0 %1128
      %v1130 = vsel %vm1126, %v1095, 0.0
      %1131 = vadd.xlane.f32.xlu0 %v1130
      %v1132 = vpop.xlane.xlu0 %1131
      %v1133 = vsel %vm1126, %v1096, 0.0
      %1134 = vadd.xlane.f32.xlu0 %v1133
      %v1135 = vpop.xlane.xlu0 %1134
      %v1136 = vsel %vm1126, %v1097, 0.0
      %1137 = vadd.xlane.f32.xlu0 %v1136
      %v1138 = vpop.xlane.xlu0 %1137
      %v1139 = vsel %vm1126, %v1098, 0.0
      %1140 = vadd.xlane.f32.xlu0 %v1139
      %v1141 = vpop.xlane.xlu0 %1140
      %v1142 = vsel %vm1126, %v1099, 0.0
      %1143 = vadd.xlane.f32.xlu0 %v1142
      %v1144 = vpop.xlane.xlu0 %1143
      %v1145 = vsel %vm1126, %v1100, 0.0
      %1146 = vadd.xlane.f32.xlu0 %v1145
      %v1147 = vpop.xlane.xlu0 %1146
      %v1148 = vsel %vm1126, %v1101, 0.0
      %1149 = vadd.xlane.f32.xlu0 %v1148
      %v1150 = vpop.xlane.xlu0 %1149
      %v1151 = vsel %vm1126, %v1102, 0.0
      %1152 = vadd.xlane.f32.xlu0 %v1151
      %v1153 = vpop.xlane.xlu0 %1152
      %v1154 = vsel %vm1126, %v1103, 0.0
      %1155 = vadd.xlane.f32.xlu0 %v1154
      %v1156 = vpop.xlane.xlu0 %1155
      %v1157 = vsel %vm1126, %v1104, 0.0
      %1158 = vadd.xlane.f32.xlu0 %v1157
      %v1159 = vpop.xlane.xlu0 %1158
      %v1160 = vsel %vm1126, %v1105, 0.0
      %1161 = vadd.xlane.f32.xlu0 %v1160
      %v1162 = vpop.xlane.xlu0 %1161
      %v1163 = vsel %vm1126, %v1106, 0.0
      %1164 = vadd.xlane.f32.xlu0 %v1163
      %v1165 = vpop.xlane.xlu0 %1164
      %v1166 = vsel %vm1126, %v1107, 0.0
      %1167 = vadd.xlane.f32.xlu0 %v1166
      %v1168 = vpop.xlane.xlu0 %1167
      %v1169 = vsel %vm1126, %v1108, 0.0
      %1170 = vadd.xlane.f32.xlu0 %v1169
      %v1171 = vpop.xlane.xlu0 %1170
      %v1172 = vsel %vm1126, %v1109, 0.0
      %1173 = vadd.xlane.f32.xlu0 %v1172
      %v1174 = vpop.xlane.xlu0 %1173
      %v1175 = vsel %vm1126, %v1110, 0.0
      %1176 = vadd.xlane.f32.xlu0 %v1175
      %v1177 = vpop.xlane.xlu0 %1176
      %v1178 = vsel %vm1126, %v1111, 0.0
      %1179 = vadd.xlane.f32.xlu0 %v1178
      %v1180 = vpop.xlane.xlu0 %1179
      %v1181 = vsel %vm1126, %v1112, 0.0
      %1182 = vadd.xlane.f32.xlu0 %v1181
      %v1183 = vpop.xlane.xlu0 %1182
      %v1184 = vsel %vm1126, %v1113, 0.0
      %1185 = vadd.xlane.f32.xlu0 %v1184
      %v1186 = vpop.xlane.xlu0 %1185
      %v1187 = vsel %vm1126, %v1114, 0.0
      %1188 = vadd.xlane.f32.xlu0 %v1187
      %v1189 = vpop.xlane.xlu0 %1188
      %v1190 = vsel %vm1126, %v1115, 0.0
      %1191 = vadd.xlane.f32.xlu0 %v1190
      %v1192 = vpop.xlane.xlu0 %1191
      %v1193 = vsel %vm1126, %v1116, 0.0
      %1194 = vadd.xlane.f32.xlu0 %v1193
      %v1195 = vpop.xlane.xlu0 %1194
      %v1196 = vsel %vm1126, %v1117, 0.0
      %1197 = vadd.xlane.f32.xlu0 %v1196
      %v1198 = vpop.xlane.xlu0 %1197
      %v1199 = vsel %vm1126, %v1118, 0.0
      %1200 = vadd.xlane.f32.xlu0 %v1199
      %v1201 = vpop.xlane.xlu0 %1200
      %v1202 = vsel %vm1126, %v1119, 0.0
      %1203 = vadd.xlane.f32.xlu0 %v1202
      %v1204 = vpop.xlane.xlu0 %1203
      %v1205 = vsel %vm1126, %v1120, 0.0
      %1206 = vadd.xlane.f32.xlu0 %v1205
      %v1207 = vpop.xlane.xlu0 %1206
      %v1208 = vsel %vm1126, %v1121, 0.0
      %1209 = vadd.xlane.f32.xlu0 %v1208
      %v1210 = vpop.xlane.xlu0 %1209
      %v1211 = vsel %vm1126, %v1122, 0.0
      %1212 = vadd.xlane.f32.xlu0 %v1211
      %v1213 = vpop.xlane.xlu0 %1212
      %v1214 = vsel %vm1126, %v1123, 0.0
      %1215 = vadd.xlane.f32.xlu0 %v1214
      %v1216 = vpop.xlane.xlu0 %1215
      %v1217 = vsel %vm1126, %v1124, 0.0
      %1218 = vadd.xlane.f32.xlu0 %v1217
      %v1219 = vpop.xlane.xlu0 %1218
      %v1220 = vsel %vm1126, %v1125, 0.0
      %1221 = vadd.xlane.f32.xlu0 %v1220
      %v1222 = vpop.xlane.xlu0 %1221
      %v1223 = vld [vmem:[#allocation2] sm:$0x1]
      %v1225 = vlaneseq
      %v1226 = vshrl.u32 %v1225, 7
      %v1227 = vsub.s32 0, %v1226
      %v1228 = vrot.slane %v1223, %v1227
      %v1230 = vadd.f32 %v1129, %v1228
      %v1231 = vadd.f32 %v1132, %v1228
      %v1232 = vadd.f32 %v1135, %v1228
      %v1233 = vadd.f32 %v1138, %v1228
      %v1234 = vadd.f32 %v1141, %v1228
      %v1235 = vadd.f32 %v1144, %v1228
      %v1236 = vadd.f32 %v1147, %v1228
      %v1237 = vadd.f32 %v1150, %v1228
      %v1238 = vadd.f32 %v1153, %v1228
      %v1239 = vadd.f32 %v1156, %v1228
      %v1240 = vadd.f32 %v1159, %v1228
      %v1241 = vadd.f32 %v1162, %v1228
      %v1242 = vadd.f32 %v1165, %v1228
      %v1243 = vadd.f32 %v1168, %v1228
      %v1244 = vadd.f32 %v1171, %v1228
      %v1245 = vadd.f32 %v1174, %v1228
      %v1246 = vadd.f32 %v1177, %v1228
      %v1247 = vadd.f32 %v1180, %v1228
      %v1248 = vadd.f32 %v1183, %v1228
      %v1249 = vadd.f32 %v1186, %v1228
      %v1250 = vadd.f32 %v1189, %v1228
      %v1251 = vadd.f32 %v1192, %v1228
      %v1252 = vadd.f32 %v1195, %v1228
      %v1253 = vadd.f32 %v1198, %v1228
      %v1254 = vadd.f32 %v1201, %v1228
      %v1255 = vadd.f32 %v1204, %v1228
      %v1256 = vadd.f32 %v1207, %v1228
      %v1257 = vadd.f32 %v1210, %v1228
      %v1258 = vadd.f32 %v1213, %v1228
      %v1259 = vadd.f32 %v1216, %v1228
      %v1260 = vadd.f32 %v1219, %v1228
      %v1261 = vadd.f32 %v1222, %v1228
      %v1262 = vxor.u32 %v1230, 2147483648
      %v1263 = vxor.u32 %v1231, 2147483648
      %v1264 = vxor.u32 %v1232, 2147483648
      %v1265 = vxor.u32 %v1233, 2147483648
      %v1266 = vxor.u32 %v1234, 2147483648
      %v1267 = vxor.u32 %v1235, 2147483648
      %v1268 = vxor.u32 %v1236, 2147483648
      %v1269 = vxor.u32 %v1237, 2147483648
      %v1270 = vxor.u32 %v1238, 2147483648
      %v1271 = vxor.u32 %v1239, 2147483648
      %v1272 = vxor.u32 %v1240, 2147483648
      %v1273 = vxor.u32 %v1241, 2147483648
      %v1274 = vxor.u32 %v1242, 2147483648
      %v1275 = vxor.u32 %v1243, 2147483648
      %v1276 = vxor.u32 %v1244, 2147483648
      %v1277 = vxor.u32 %v1245, 2147483648
      %v1278 = vxor.u32 %v1246, 2147483648
      %v1279 = vxor.u32 %v1247, 2147483648
      %v1280 = vxor.u32 %v1248, 2147483648
      %v1281 = vxor.u32 %v1249, 2147483648
      %v1282 = vxor.u32 %v1250, 2147483648
      %v1283 = vxor.u32 %v1251, 2147483648
      %v1284 = vxor.u32 %v1252, 2147483648
      %v1285 = vxor.u32 %v1253, 2147483648
      %v1286 = vxor.u32 %v1254, 2147483648
      %v1287 = vxor.u32 %v1255, 2147483648
      %v1288 = vxor.u32 %v1256, 2147483648
      %v1289 = vxor.u32 %v1257, 2147483648
      %v1290 = vxor.u32 %v1258, 2147483648
      %v1291 = vxor.u32 %v1259, 2147483648
      %v1292 = vxor.u32 %v1260, 2147483648
      %v1293 = vxor.u32 %v1261, 2147483648
      %v1294 = vmul.f32 %v1262, 1.442695
      %v1295 = vpow.pop %v1294
      %v1296 = vmul.f32 %v1263, 1.442695
      %v1297 = vpow.pop %v1296
      %v1298 = vmul.f32 %v1264, 1.442695
      %v1299 = vpow.pop %v1298
      %v1300 = vmul.f32 %v1265, 1.442695
      %v1301 = vpow.pop %v1300
      %v1302 = vmul.f32 %v1266, 1.442695
      %v1303 = vpow.pop %v1302
      %v1304 = vmul.f32 %v1267, 1.442695
      %v1305 = vpow.pop %v1304
      %v1306 = vmul.f32 %v1268, 1.442695
      %v1307 = vpow.pop %v1306
      %v1308 = vmul.f32 %v1269, 1.442695
      %v1309 = vpow.pop %v1308
      %v1310 = vmul.f32 %v1270, 1.442695
      %v1311 = vpow.pop %v1310
      %v1312 = vmul.f32 %v1271, 1.442695
      %v1313 = vpow.pop %v1312
      %v1314 = vmul.f32 %v1272, 1.442695
      %v1315 = vpow.pop %v1314
      %v1316 = vmul.f32 %v1273, 1.442695
      %v1317 = vpow.pop %v1316
      %v1318 = vmul.f32 %v1274, 1.442695
      %v1319 = vpow.pop %v1318
      %v1320 = vmul.f32 %v1275, 1.442695
      %v1321 = vpow.pop %v1320
      %v1322 = vmul.f32 %v1276, 1.442695
      %v1323 = vpow.pop %v1322
      %v1324 = vmul.f32 %v1277, 1.442695
      %v1325 = vpow.pop %v1324
      %v1326 = vmul.f32 %v1278, 1.442695
      %v1327 = vpow.pop %v1326
      %v1328 = vmul.f32 %v1279, 1.442695
      %v1329 = vpow.pop %v1328
      %v1330 = vmul.f32 %v1280, 1.442695
      %v1331 = vpow.pop %v1330
      %v1332 = vmul.f32 %v1281, 1.442695
      %v1333 = vpow.pop %v1332
      %v1334 = vmul.f32 %v1282, 1.442695
      %v1335 = vpow.pop %v1334
      %v1336 = vmul.f32 %v1283, 1.442695
      %v1337 = vpow.pop %v1336
      %v1338 = vmul.f32 %v1284, 1.442695
      %v1339 = vpow.pop %v1338
      %v1340 = vmul.f32 %v1285, 1.442695
      %v1341 = vpow.pop %v1340
      %v1342 = vmul.f32 %v1286, 1.442695
      %v1343 = vpow.pop %v1342
      %v1344 = vmul.f32 %v1287, 1.442695
      %v1345 = vpow.pop %v1344
      %v1346 = vmul.f32 %v1288, 1.442695
      %v1347 = vpow.pop %v1346
      %v1348 = vmul.f32 %v1289, 1.442695
      %v1349 = vpow.pop %v1348
      %v1350 = vmul.f32 %v1290, 1.442695
      %v1351 = vpow.pop %v1350
      %v1352 = vmul.f32 %v1291, 1.442695
      %v1353 = vpow.pop %v1352
      %v1354 = vmul.f32 %v1292, 1.442695
      %v1355 = vpow.pop %v1354
      %v1356 = vmul.f32 %v1293, 1.442695
      %v1357 = vpow.pop %v1356
      %v1358 = vadd.f32 %v1295, 1.0
      %v1359 = vadd.f32 %v1297, 1.0
      %v1360 = vadd.f32 %v1299, 1.0
      %v1361 = vadd.f32 %v1301, 1.0
      %v1362 = vadd.f32 %v1303, 1.0
      %v1363 = vadd.f32 %v1305, 1.0
      %v1364 = vadd.f32 %v1307, 1.0
      %v1365 = vadd.f32 %v1309, 1.0
      %v1366 = vadd.f32 %v1311, 1.0
      %v1367 = vadd.f32 %v1313, 1.0
      %v1368 = vadd.f32 %v1315, 1.0
      %v1369 = vadd.f32 %v1317, 1.0
      %v1370 = vadd.f32 %v1319, 1.0
      %v1371 = vadd.f32 %v1321, 1.0
      %v1372 = vadd.f32 %v1323, 1.0
      %v1373 = vadd.f32 %v1325, 1.0
      %v1374 = vadd.f32 %v1327, 1.0
      %v1375 = vadd.f32 %v1329, 1.0
      %v1376 = vadd.f32 %v1331, 1.0
      %v1377 = vadd.f32 %v1333, 1.0
      %v1378 = vadd.f32 %v1335, 1.0
      %v1379 = vadd.f32 %v1337, 1.0
      %v1380 = vadd.f32 %v1339, 1.0
      %v1381 = vadd.f32 %v1341, 1.0
      %v1382 = vadd.f32 %v1343, 1.0
      %v1383 = vadd.f32 %v1345, 1.0
      %v1384 = vadd.f32 %v1347, 1.0
      %v1385 = vadd.f32 %v1349, 1.0
      %v1386 = vadd.f32 %v1351, 1.0
      %v1387 = vadd.f32 %v1353, 1.0
      %v1388 = vadd.f32 %v1355, 1.0
      %v1389 = vadd.f32 %v1357, 1.0
      %v1390 = vrcp.pop %v1358
      %v1391 = vmul.f32 1.0, %v1390
      %v1392 = vrcp.pop %v1359
      %v1393 = vmul.f32 1.0, %v1392
      %v1394 = vrcp.pop %v1360
      %v1395 = vmul.f32 1.0, %v1394
      %v1396 = vrcp.pop %v1361
      %v1397 = vmul.f32 1.0, %v1396
      %v1398 = vrcp.pop %v1362
      %v1399 = vmul.f32 1.0, %v1398
      %v1400 = vrcp.pop %v1363
      %v1401 = vmul.f32 1.0, %v1400
      %v1402 = vrcp.pop %v1364
      %v1403 = vmul.f32 1.0, %v1402
      %v1404 = vrcp.pop %v1365
      %v1405 = vmul.f32 1.0, %v1404
      %v1406 = vrcp.pop %v1366
      %v1407 = vmul.f32 1.0, %v1406
      %v1408 = vrcp.pop %v1367
      %v1409 = vmul.f32 1.0, %v1408
      %v1410 = vrcp.pop %v1368
      %v1411 = vmul.f32 1.0, %v1410
      %v1412 = vrcp.pop %v1369
      %v1413 = vmul.f32 1.0, %v1412
      %v1414 = vrcp.pop %v1370
      %v1415 = vmul.f32 1.0, %v1414
      %v1416 = vrcp.pop %v1371
      %v1417 = vmul.f32 1.0, %v1416
      %v1418 = vrcp.pop %v1372
      %v1419 = vmul.f32 1.0, %v1418
      %v1420 = vrcp.pop %v1373
      %v1421 = vmul.f32 1.0, %v1420
      %v1422 = vrcp.pop %v1374
      %v1423 = vmul.f32 1.0, %v1422
      %v1424 = vrcp.pop %v1375
      %v1425 = vmul.f32 1.0, %v1424
      %v1426 = vrcp.pop %v1376
      %v1427 = vmul.f32 1.0, %v1426
      %v1428 = vrcp.pop %v1377
      %v1429 = vmul.f32 1.0, %v1428
      %v1430 = vrcp.pop %v1378
      %v1431 = vmul.f32 1.0, %v1430
      %v1432 = vrcp.pop %v1379
      %v1433 = vmul.f32 1.0, %v1432
      %v1434 = vrcp.pop %v1380
      %v1435 = vmul.f32 1.0, %v1434
      %v1436 = vrcp.pop %v1381
      %v1437 = vmul.f32 1.0, %v1436
      %v1438 = vrcp.pop %v1382
      %v1439 = vmul.f32 1.0, %v1438
      %v1440 = vrcp.pop %v1383
      %v1441 = vmul.f32 1.0, %v1440
      %v1442 = vrcp.pop %v1384
      %v1443 = vmul.f32 1.0, %v1442
      %v1444 = vrcp.pop %v1385
      %v1445 = vmul.f32 1.0, %v1444
      %v1446 = vrcp.pop %v1386
      %v1447 = vmul.f32 1.0, %v1446
      %v1448 = vrcp.pop %v1387
      %v1449 = vmul.f32 1.0, %v1448
      %v1450 = vrcp.pop %v1388
      %v1451 = vmul.f32 1.0, %v1450
      %v1452 = vrcp.pop %v1389
      %v1453 = vmul.f32 1.0, %v1452
      %v1454 = vunpack.c.l.bf16 %v366
      %v1455 = vunpack.c.l.bf16 %v367
      %v1456 = vunpack.c.l.bf16 %v368
      %v1457 = vunpack.c.l.bf16 %v369
      %v1458 = vunpack.c.l.bf16 %v370
      %v1459 = vunpack.c.l.bf16 %v371
      %v1460 = vunpack.c.l.bf16 %v372
      %v1461 = vunpack.c.l.bf16 %v373
      %v1462 = vunpack.c.l.bf16 %v374
      %v1463 = vunpack.c.l.bf16 %v375
      %v1464 = vunpack.c.l.bf16 %v376
      %v1465 = vunpack.c.l.bf16 %v377
      %v1466 = vunpack.c.l.bf16 %v378
      %v1467 = vunpack.c.l.bf16 %v379
      %v1468 = vunpack.c.l.bf16 %v380
      %v1469 = vunpack.c.l.bf16 %v381
      %v1470 = vunpack.c.l.bf16 %v382
      %v1471 = vunpack.c.l.bf16 %v383
      %v1472 = vunpack.c.l.bf16 %v384
      %v1473 = vunpack.c.l.bf16 %v385
      %v1474 = vunpack.c.l.bf16 %v386
      %v1475 = vunpack.c.l.bf16 %v387
      %v1476 = vunpack.c.l.bf16 %v388
      %v1477 = vunpack.c.l.bf16 %v389
      %v1478 = vunpack.c.l.bf16 %v390
      %v1479 = vunpack.c.l.bf16 %v391
      %v1480 = vunpack.c.l.bf16 %v392
      %v1481 = vunpack.c.l.bf16 %v393
      %v1482 = vunpack.c.l.bf16 %v394
      %v1483 = vunpack.c.l.bf16 %v395
      %v1484 = vunpack.c.l.bf16 %v396
      %v1485 = vunpack.c.l.bf16 %v397
      %1487 = vset.pattern.permute.xlu0 0
      %1488 = vperm.xlu0 %1487, %v1391
      %v1489 = vpop.permute.xlu0 %1488
      %1492 = vset.pattern.permute.xlu0 0
      %1493 = vperm.xlu0 %1492, %v1393
      %v1494 = vpop.permute.xlu0 %1493
      %1497 = vset.pattern.permute.xlu0 0
      %1498 = vperm.xlu0 %1497, %v1395
      %v1499 = vpop.permute.xlu0 %1498
      %1502 = vset.pattern.permute.xlu0 0
      %1503 = vperm.xlu0 %1502, %v1397
      %v1504 = vpop.permute.xlu0 %1503
      %1507 = vset.pattern.permute.xlu0 0
      %1508 = vperm.xlu0 %1507, %v1399
      %v1509 = vpop.permute.xlu0 %1508
      %1512 = vset.pattern.permute.xlu0 0
      %1513 = vperm.xlu0 %1512, %v1401
      %v1514 = vpop.permute.xlu0 %1513
      %1517 = vset.pattern.permute.xlu0 0
      %1518 = vperm.xlu0 %1517, %v1403
      %v1519 = vpop.permute.xlu0 %1518
      %1522 = vset.pattern.permute.xlu0 0
      %1523 = vperm.xlu0 %1522, %v1405
      %v1524 = vpop.permute.xlu0 %1523
      %1527 = vset.pattern.permute.xlu0 0
      %1528 = vperm.xlu0 %1527, %v1407
      %v1529 = vpop.permute.xlu0 %1528
      %1532 = vset.pattern.permute.xlu0 0
      %1533 = vperm.xlu0 %1532, %v1409
      %v1534 = vpop.permute.xlu0 %1533
      %1537 = vset.pattern.permute.xlu0 0
      %1538 = vperm.xlu0 %1537, %v1411
      %v1539 = vpop.permute.xlu0 %1538
      %1542 = vset.pattern.permute.xlu0 0
      %1543 = vperm.xlu0 %1542, %v1413
      %v1544 = vpop.permute.xlu0 %1543
      %1547 = vset.pattern.permute.xlu0 0
      %1548 = vperm.xlu0 %1547, %v1415
      %v1549 = vpop.permute.xlu0 %1548
      %1552 = vset.pattern.permute.xlu0 0
      %1553 = vperm.xlu0 %1552, %v1417
      %v1554 = vpop.permute.xlu0 %1553
      %1557 = vset.pattern.permute.xlu0 0
      %1558 = vperm.xlu0 %1557, %v1419
      %v1559 = vpop.permute.xlu0 %1558
      %1562 = vset.pattern.permute.xlu0 0
      %1563 = vperm.xlu0 %1562, %v1421
      %v1564 = vpop.permute.xlu0 %1563
      %1567 = vset.pattern.permute.xlu0 0
      %1568 = vperm.xlu0 %1567, %v1423
      %v1569 = vpop.permute.xlu0 %1568
      %1572 = vset.pattern.permute.xlu0 0
      %1573 = vperm.xlu0 %1572, %v1425
      %v1574 = vpop.permute.xlu0 %1573
      %1577 = vset.pattern.permute.xlu0 0
      %1578 = vperm.xlu0 %1577, %v1427
      %v1579 = vpop.permute.xlu0 %1578
      %1582 = vset.pattern.permute.xlu0 0
      %1583 = vperm.xlu0 %1582, %v1429
      %v1584 = vpop.permute.xlu0 %1583
      %1587 = vset.pattern.permute.xlu0 0
      %1588 = vperm.xlu0 %1587, %v1431
      %v1589 = vpop.permute.xlu0 %1588
      %1592 = vset.pattern.permute.xlu0 0
      %1593 = vperm.xlu0 %1592, %v1433
      %v1594 = vpop.permute.xlu0 %1593
      %1597 = vset.pattern.permute.xlu0 0
      %1598 = vperm.xlu0 %1597, %v1435
      %v1599 = vpop.permute.xlu0 %1598
      %1602 = vset.pattern.permute.xlu0 0
      %1603 = vperm.xlu0 %1602, %v1437
      %v1604 = vpop.permute.xlu0 %1603
      %1607 = vset.pattern.permute.xlu0 0
      %1608 = vperm.xlu0 %1607, %v1439
      %v1609 = vpop.permute.xlu0 %1608
      %1612 = vset.pattern.permute.xlu0 0
      %1613 = vperm.xlu0 %1612, %v1441
      %v1614 = vpop.permute.xlu0 %1613
      %1617 = vset.pattern.permute.xlu0 0
      %1618 = vperm.xlu0 %1617, %v1443
      %v1619 = vpop.permute.xlu0 %1618
      %1622 = vset.pattern.permute.xlu0 0
      %1623 = vperm.xlu0 %1622, %v1445
      %v1624 = vpop.permute.xlu0 %1623
      %1627 = vset.pattern.permute.xlu0 0
      %1628 = vperm.xlu0 %1627, %v1447
      %v1629 = vpop.permute.xlu0 %1628
      %1632 = vset.pattern.permute.xlu0 0
      %1633 = vperm.xlu0 %1632, %v1449
      %v1634 = vpop.permute.xlu0 %1633
      %1637 = vset.pattern.permute.xlu0 0
      %1638 = vperm.xlu0 %1637, %v1451
      %v1639 = vpop.permute.xlu0 %1638
      %1642 = vset.pattern.permute.xlu0 0
      %1643 = vperm.xlu0 %1642, %v1453
      %v1644 = vpop.permute.xlu0 %1643
      %v1646 = vmul.f32 %v1454, %v1489
      %v1647 = vmul.f32 %v1455, %v1494
      %v1648 = vmul.f32 %v1456, %v1499
      %v1649 = vmul.f32 %v1457, %v1504
      %v1650 = vmul.f32 %v1458, %v1509
      %v1651 = vmul.f32 %v1459, %v1514
      %v1652 = vmul.f32 %v1460, %v1519
      %v1653 = vmul.f32 %v1461, %v1524
      %v1654 = vmul.f32 %v1462, %v1529
      %v1655 = vmul.f32 %v1463, %v1534
      %v1656 = vmul.f32 %v1464, %v1539
      %v1657 = vmul.f32 %v1465, %v1544
      %v1658 = vmul.f32 %v1466, %v1549
      %v1659 = vmul.f32 %v1467, %v1554
      %v1660 = vmul.f32 %v1468, %v1559
      %v1661 = vmul.f32 %v1469, %v1564
      %v1662 = vmul.f32 %v1470, %v1569
      %v1663 = vmul.f32 %v1471, %v1574
      %v1664 = vmul.f32 %v1472, %v1579
      %v1665 = vmul.f32 %v1473, %v1584
      %v1666 = vmul.f32 %v1474, %v1589
      %v1667 = vmul.f32 %v1475, %v1594
      %v1668 = vmul.f32 %v1476, %v1599
      %v1669 = vmul.f32 %v1477, %v1604
      %v1670 = vmul.f32 %v1478, %v1609
      %v1671 = vmul.f32 %v1479, %v1614
      %v1672 = vmul.f32 %v1480, %v1619
      %v1673 = vmul.f32 %v1481, %v1624
      %v1674 = vmul.f32 %v1482, %v1629
      %v1675 = vmul.f32 %v1483, %v1634
      %v1676 = vmul.f32 %v1484, %v1639
      %v1677 = vmul.f32 %v1485, %v1644
      %1678 = vst.msk [vmem:[%s331] sm:$0xff] %vm501, %v1646
      %1679 = vst.msk [vmem:[%s331 + $0x8] sm:$0xff] %vm501, %v1647
      %1680 = vst.msk [vmem:[%s331 + $0x10] sm:$0xff] %vm501, %v1648
      %1681 = vst.msk [vmem:[%s331 + $0x18] sm:$0xff] %vm501, %v1649
      %1682 = vst.msk [vmem:[%s331 + $0x20] sm:$0xff] %vm501, %v1650
      %1683 = vst.msk [vmem:[%s331 + $0x28] sm:$0xff] %vm501, %v1651
      %1684 = vst.msk [vmem:[%s331 + $0x30] sm:$0xff] %vm501, %v1652
      %1685 = vst.msk [vmem:[%s331 + $0x38] sm:$0xff] %vm501, %v1653
      %1686 = vst.msk [vmem:[%s331 + $0x40] sm:$0xff] %vm501, %v1654
      %1687 = vst.msk [vmem:[%s331 + $0x48] sm:$0xff] %vm501, %v1655
      %1688 = vst.msk [vmem:[%s331 + $0x50] sm:$0xff] %vm501, %v1656
      %1689 = vst.msk [vmem:[%s331 + $0x58] sm:$0xff] %vm501, %v1657
      %1690 = vst.msk [vmem:[%s331 + $0x60] sm:$0xff] %vm501, %v1658
      %1691 = vst.msk [vmem:[%s331 + $0x68] sm:$0xff] %vm501, %v1659
      %1692 = vst.msk [vmem:[%s331 + $0x70] sm:$0xff] %vm501, %v1660
      %1693 = vst.msk [vmem:[%s331 + $0x78] sm:$0xff] %vm501, %v1661
      %1694 = vst.msk [vmem:[%s331 + $0x80] sm:$0xff] %vm501, %v1662
      %1695 = vst.msk [vmem:[%s331 + $0x88] sm:$0xff] %vm501, %v1663
      %1696 = vst.msk [vmem:[%s331 + $0x90] sm:$0xff] %vm501, %v1664
      %1697 = vst.msk [vmem:[%s331 + $0x98] sm:$0xff] %vm501, %v1665
      %1698 = vst.msk [vmem:[%s331 + $0xa0] sm:$0xff] %vm501, %v1666
      %1699 = vst.msk [vmem:[%s331 + $0xa8] sm:$0xff] %vm501, %v1667
      %1700 = vst.msk [vmem:[%s331 + $0xb0] sm:$0xff] %vm501, %v1668
      %1701 = vst.msk [vmem:[%s331 + $0xb8] sm:$0xff] %vm501, %v1669
      %1702 = vst.msk [vmem:[%s331 + $0xc0] sm:$0xff] %vm501, %v1670
      %1703 = vst.msk [vmem:[%s331 + $0xc8] sm:$0xff] %vm501, %v1671
      %1704 = vst.msk [vmem:[%s331 + $0xd0] sm:$0xff] %vm501, %v1672
      %1705 = vst.msk [vmem:[%s331 + $0xd8] sm:$0xff] %vm501, %v1673
      %1706 = vst.msk [vmem:[%s331 + $0xe0] sm:$0xff] %vm501, %v1674
      %1707 = vst.msk [vmem:[%s331 + $0xe8] sm:$0xff] %vm501, %v1675
      %1708 = vst.msk [vmem:[%s331 + $0xf0] sm:$0xff] %vm501, %v1676
      %1709 = vst.msk [vmem:[%s331 + $0xf8] sm:$0xff] %vm501, %v1677
      %s1710 = smul.u32 32, %s21
      %p1711 = scmp.lt.s32.totalorder %s1710, 63
      %s1712 = scalar_select %p1711, %s1710, 63
      %s1713 = smul.addr %s1712, 8
      %s1714 = scalar_lea.vmem %s8, %s1713
      // Predicated region
      $region53: #{tpu_custom_call.1} parent=51 // pred_check
        %p1715 = pneg %p217
      $region54: #{tpu_custom_call.1} parent=51 // pred_check_branch
        %1717 = sbr.rel (%p1715) target = $region56
      $region55: #{tpu_custom_call.1} parent=51 // pred_region
        %s1718 = smul.u32 32, %s21
      $region56: #{tpu_custom_call.1} parent=51 // pred_fallthru
        _
    $region52: #{tpu_custom_call.1} parent=5 // pred_fallthru
      _
    %p1719 = scmp.le.s32.totalorder 2, %s16
    // Predicated region
    $region57: #{tpu_custom_call.1} parent=5 // pred_check
      %p1720 = pneg %p1719
    $region58: #{tpu_custom_call.1} parent=5 // pred_check_branch
      %1722 = sbr.rel (%p1720) target = $region60
    $region59: #{tpu_custom_call.1} parent=5 // pred_region
      %s1723 = ssub.s32 %s16, 2
      // Predicated region
      $region61: #{tpu_custom_call.1} parent=59 // pred_check
        %p1724 = pneg %p223
      $region62: #{tpu_custom_call.1} parent=59 // pred_check_branch
        %1726 = sbr.rel (%p1724) target = $region64
      $region63: #{tpu_custom_call.1} parent=59 // pred_region
        %s1727 = smul.u32 32, %s22
        %p1728 = scmp.lt.s32.totalorder %s1727, 63
        %s1729 = scalar_select %p1728, %s1727, 63
        %s1730 = smul.addr %s1729, 8
        %s1731 = scalar_lea.vmem %s8, %s1730
      $region64: #{tpu_custom_call.1} parent=59 // pred_fallthru
        _
    $region60: #{tpu_custom_call.1} parent=5 // pred_fallthru
      _
  $region6: #{tpu_custom_call.1} parent=0 // loop_footer
    %s20 = sadd.s32 1, %s16
  $region7: #{tpu_custom_call.1} parent=0 // loop_footer_branch
    %15 = sbr.rel target = $region3
  $region8: #{tpu_custom_call.1} parent=0 // loop_exit
    _

</llo_original>
